<compile_context>
chip_gen: v7x
topology: tpu7x:2x2x1
jax: 0.10.0
libtpu: 0.0.40
codegen_flags: <defaults>
</compile_context>

<pallas_src>
import functools

import jax
import jax.numpy as jnp
from jax import lax
from jax.experimental import pallas as pl
from jax.experimental.pallas import tpu as pltpu

LANE = 128


# --------------------------------------------------------------------------
# Fused Pallas kernel: MLP (Linear-ReLU-Linear) + k-step adaptive propagation
# --------------------------------------------------------------------------
def _fused_airgnn_kernel(feat_ref, w1_ref, b1_ref, w2_ref, b2_ref, adj_ref,
                         o_ref, *, k: int, lambda_amp: float):
    # ---- MLP (Dropout = identity in eval mode) ----------------------------
    x_in = feat_ref[...].astype(jnp.float32)
    h = jnp.dot(x_in, w1_ref[...], preferred_element_type=jnp.float32)
    h = jnp.maximum(h + b1_ref[...], 0.0)                       # Linear + ReLU
    h = jnp.dot(h, w2_ref[...], preferred_element_type=jnp.float32)
    h = h + b2_ref[...]                                         # Linear
    # NOTE: zero-padded *node* rows pick up the bias values here, but padded
    # adjacency columns are zero so they never contaminate real rows; they are
    # sliced away on the host.

    # ---- AdaptiveConv: k proximal-gradient steps ---------------------------
    # gamma*2*(1-lambda_amp) == 1 exactly, so y = A_hat @ x.
    gamma = 1.0 / (2.0 * (1.0 - lambda_amp))
    thresh = gamma * lambda_amp                                  # hoisted const
    adj = adj_ref[...]                                           # bf16 [Np, Np]
    hh = h
    xk = hh
    for _ in range(k):                                           # small static k
        y = jnp.dot(adj, xk.astype(jnp.bfloat16),
                    preferred_element_type=jnp.float32)          # A_hat @ x
        d = y - hh
        # proximal_L21 row-wise shrink, single-rsqrt form:
        #   coef = max(||d|| - thresh, 0)/||d||  ==  max(1 - thresh/||d||, 0)
        # eps keeps rsqrt finite on all-zero rows (coef correctly clamps to 0).
        sumsq = jnp.sum(d * d, axis=1, keepdims=True)            # [Np, 1]
        coef = jnp.maximum(1.0 - thresh * lax.rsqrt(sumsq + 1e-30), 0.0)
        xk = hh + coef * d
    o_ref[...] = xk.astype(o_ref.dtype)


# --------------------------------------------------------------------------
# Padding helpers
# --------------------------------------------------------------------------
def _round_up(v, m=LANE):
    return ((v + m - 1) // m) * m


def _pad2(x, shape):
    """Zero-pad a 2-D array up to `shape` (trailing pad only)."""
    pr = shape[0] - x.shape[0]
    pc = shape[1] - x.shape[1]
    if pr == 0 and pc == 0:
        return x
    return jnp.pad(x, ((0, pr), (0, pc)))


# --------------------------------------------------------------------------
# One-time setup: pad/cast weights and adjacency (hoisted out of the hot path)
# --------------------------------------------------------------------------
def prepare_airgnn(adj_hat, params):
    """Pad weights/bias/adjacency to lane-dense shapes and cast adj to bf16.

    Call ONCE at model setup; the returned dict is reused by every forward
    call so no per-call padding/casting of static operands hits HBM.
    """
    (w1, b1), (w2, b2) = params
    n = adj_hat.shape[0]
    f_in, hid = w1.shape
    f_out = w2.shape[1]

    n_p = _round_up(n)
    f_in_p, hid_p, f_out_p = _round_up(f_in), _round_up(hid), _round_up(f_out)

    prepared = {
        # bf16 adjacency (native MXU input); zero-padded rows/cols are exact.
        "adj": _pad2(adj_hat, (n_p, n_p)).astype(jnp.bfloat16),
        "w1": _pad2(w1, (f_in_p, hid_p)),
        "b1": _pad2(b1.reshape(1, -1), (1, hid_p)),
        "w2": _pad2(w2, (hid_p, f_out_p)),
        "b2": _pad2(b2.reshape(1, -1), (1, f_out_p)),
        "f_out": f_out,
    }
    # Materialize now so setup cost never lands inside the forward call.
    jax.block_until_ready(jax.tree_util.tree_leaves(
        {k: v for k, v in prepared.items() if k != "f_out"}))
    return prepared


# --------------------------------------------------------------------------
# Jitted forward: pad feat, single fused pallas_call, slice result back
# --------------------------------------------------------------------------
@functools.partial(jax.jit, static_argnames=("k", "lambda_amp", "f_out"))
def _airgnn_apply(feat, adj_p, w1_p, b1_p, w2_p, b2_p, *, k, lambda_amp, f_out):
    n, f_in = feat.shape
    n_p = adj_p.shape[0]
    f_in_p, hid_p = w1_p.shape
    f_out_p = w2_p.shape[1]

    # Only per-call padding left in the hot path: the node features.
    feat_p = _pad2(feat, (n_p, f_in_p))

    # Explicit VMEM budget: padded operands (double-buffered by the pipeline)
    # plus headroom, capped at 64 MiB so the same setting is valid on v7x.
    operand_bytes = (
        n_p * f_in_p * 4 + f_in_p * hid_p * 4 + hid_p * 4 +
        hid_p * f_out_p * 4 + f_out_p * 4 + n_p * n_p * 2 + n_p * f_out_p * 4)
    vmem_limit = min(2 * operand_bytes + (16 << 20), 64 << 20)

    out_p = pl.pallas_call(
        functools.partial(_fused_airgnn_kernel, k=k, lambda_amp=lambda_amp),
        out_shape=jax.ShapeDtypeStruct((n_p, f_out_p), feat.dtype),
        grid=(1,),
        in_specs=[
            pl.BlockSpec((n_p, f_in_p), lambda i: (0, 0)),       # feat
            pl.BlockSpec((f_in_p, hid_p), lambda i: (0, 0)),     # W1
            pl.BlockSpec((1, hid_p), lambda i: (0, 0)),          # b1
            pl.BlockSpec((hid_p, f_out_p), lambda i: (0, 0)),    # W2
            pl.BlockSpec((1, f_out_p), lambda i: (0, 0)),        # b2
            pl.BlockSpec((n_p, n_p), lambda i: (0, 0)),          # A_hat (bf16)
        ],
        out_specs=pl.BlockSpec((n_p, f_out_p), lambda i: (0, 0)),
        compiler_params=pltpu.CompilerParams(
            dimension_semantics=("arbitrary",),
            vmem_limit_bytes=int(vmem_limit)),
    )(feat_p, w1_p, b1_p, w2_p, b2_p, adj_p)

    return out_p[:n, :f_out]


def airgnn_forward(prepared, feat, *, k=3, lambda_amp=0.5):
    if not (0.0 <= lambda_amp < 1.0):
        raise ValueError("lambda_amp must be in [0, 1): gamma = 1/(2*(1-lambda_amp))")
    return _airgnn_apply(feat, prepared["adj"], prepared["w1"], prepared["b1"],
                         prepared["w2"], prepared["b2"],
                         k=k, lambda_amp=lambda_amp, f_out=prepared["f_out"])


# --------------------------------------------------------------------------
# Model glue (parameter init, graph normalization) + pure-JAX reference
# --------------------------------------------------------------------------
def init_linear_params(key, fan_in, fan_out):
    """Deterministic init matching torch.nn.Linear shapes (W stored [in, out])."""
    kw, kb = jax.random.split(key)
    bound = 1.0 / jnp.sqrt(float(fan_in))
    w = jax.random.uniform(kw, (fan_in, fan_out), jnp.float32, -bound, bound)
    b = jax.random.uniform(kb, (fan_out,), jnp.float32, -bound, bound)
    return w, b


def build_norm_adj(adj):
    """'both' normalization with self-loops: D^-1/2 (A + I) D^-1/2."""
    n = adj.shape[0]
    a = adj + jnp.eye(n, dtype=adj.dtype)
    deg = jnp.sum(a, axis=1)
    d_inv_sqrt = jnp.where(deg > 0, 1.0 / jnp.sqrt(deg), 0.0)
    return a * d_inv_sqrt[:, None] * d_inv_sqrt[None, :]


def airgnn_reference(adj_hat, feat, params, *, k=3, lambda_amp=0.5):
    """Full-f32 pure-JAX reference of the same forward pass."""
    (w1, b1), (w2, b2) = params
    h = jnp.maximum(feat @ w1 + b1, 0.0) @ w2 + b2
    gamma = 1.0 / (2.0 * (1.0 - lambda_amp))
    thresh = gamma * lambda_amp
    hh = h
    x = hh
    for _ in range(k):
        y = adj_hat @ x
        d = y - hh
        norm = jnp.sqrt(jnp.sum(d * d, axis=1, keepdims=True))
        coef = jnp.where(norm > 0.0, jnp.maximum(norm - thresh, 0.0) / jnp.where(norm > 0.0, norm, 1.0), 0.0)
        x = hh + coef * d
    return x


# --------------------------------------------------------------------------
# Main
# --------------------------------------------------------------------------
if __name__ == "__main__":
    key = jax.random.PRNGKey(0)
    k_feat, k_adj, k_w1, k_w2 = jax.random.split(key, 4)

    # Small problem: N=64 nodes, in_feats=32, hids=[64], out_feats=16
    N, IN_FEATS, HID, OUT_FEATS = 64, 32, 64, 16
    K, LAMBDA_AMP = 3, 0.5

    # Node features
    feat = jax.random.normal(k_feat, (N, IN_FEATS), jnp.float32)

    # Random undirected graph (Erdos-Renyi-ish), then 'both' normalization
    rand = jax.random.uniform(k_adj, (N, N))
    adj = (rand < 0.1).astype(jnp.float32)
    adj = jnp.maximum(adj, adj.T)
    adj = adj * (1.0 - jnp.eye(N, dtype=jnp.float32))  # no pre-existing self loops
    adj_hat = build_norm_adj(adj)

    # Deterministic parameters (Linear(in->hid), Linear(hid->out), bias=True)
    params = (
        init_linear_params(k_w1, IN_FEATS, HID),
        init_linear_params(k_w2, HID, OUT_FEATS),
    )

    # One-time setup (padding / bf16 cast hoisted out of the forward path).
    prepared = prepare_airgnn(adj_hat, params)

    out = airgnn_forward(prepared, feat, k=K, lambda_amp=LAMBDA_AMP)
    out = jax.block_until_ready(out)

    assert out.shape == (N, OUT_FEATS) and out.dtype == jnp.float32
    assert bool(jnp.all(jnp.isfinite(out)))

    # Tolerance check vs full-f32 reference (bf16 adjacency -> loose tolerance).
    ref = airgnn_reference(adj_hat, feat, params, k=K, lambda_amp=LAMBDA_AMP)
    assert bool(jnp.allclose(out, ref, atol=5e-2, rtol=5e-2))

    print("KERNEL_OK")
</pallas_src>

<mosaic_0001>
module attributes {stable_mosaic.version = 11 : i64} {
  func.func @_fused_airgnn_kernel(%arg0: i32, %arg1: memref<128x128xf32, #tpu.memory_space<vmem>>, %arg2: memref<128x128xf32, #tpu.memory_space<vmem>>, %arg3: memref<1x128xf32, #tpu.memory_space<vmem>>, %arg4: memref<128x128xf32, #tpu.memory_space<vmem>>, %arg5: memref<1x128xf32, #tpu.memory_space<vmem>>, %arg6: memref<128x128xbf16, #tpu.memory_space<vmem>>, %arg7: memref<128x128xf32, #tpu.memory_space<vmem>>) attributes {dimension_semantics = [#tpu.dimension_semantics<arbitrary>], iteration_bounds = array<i64: 1>, scalar_prefetch = 0 : i64, scratch_operands = 0 : i64, tpu.core_type = #tpu.core_type<tc>, window_params = [{pipeline_mode = #tpu.pipeline_mode<synchronous>, transform_indices = @transform_0, window_bounds = array<i64: 128, 128>}, {pipeline_mode = #tpu.pipeline_mode<synchronous>, transform_indices = @transform_1, window_bounds = array<i64: 128, 128>}, {pipeline_mode = #tpu.pipeline_mode<synchronous>, transform_indices = @transform_2, window_bounds = array<i64: 1, 128>}, {pipeline_mode = #tpu.pipeline_mode<synchronous>, transform_indices = @transform_3, window_bounds = array<i64: 128, 128>}, {pipeline_mode = #tpu.pipeline_mode<synchronous>, transform_indices = @transform_4, window_bounds = array<i64: 1, 128>}, {pipeline_mode = #tpu.pipeline_mode<synchronous>, transform_indices = @transform_5, window_bounds = array<i64: 128, 128>}, {pipeline_mode = #tpu.pipeline_mode<synchronous>, transform_indices = @transform_6, window_bounds = array<i64: 128, 128>}]} {
    %c0 = arith.constant 0 : index
    %c0_0 = arith.constant 0 : index
    %0 = vector.load %arg1[%c0, %c0_0] : memref<128x128xf32, #tpu.memory_space<vmem>>, vector<128x128xf32>
    %c0_1 = arith.constant 0 : index
    %c0_2 = arith.constant 0 : index
    %1 = vector.load %arg2[%c0_1, %c0_2] : memref<128x128xf32, #tpu.memory_space<vmem>>, vector<128x128xf32>
    %cst = arith.constant dense<0.000000e+00> : vector<128x128xf32>
    %2 = tpu.matmul %0, %1, %cst {dimension_numbers = #tpu.dot_dimension_numbers<[1], [0], [0], [1], [0, 0, 1, 1], [], []>} : vector<128x128xf32>, vector<128x128xf32>, vector<128x128xf32> -> vector<128x128xf32>
    %c0_3 = arith.constant 0 : index
    %c0_4 = arith.constant 0 : index
    %3 = vector.load %arg3[%c0_3, %c0_4] : memref<1x128xf32, #tpu.memory_space<vmem>>, vector<1x128xf32>
    %4 = vector.broadcast %3 : vector<1x128xf32> to vector<128x128xf32>
    %5 = arith.addf %2, %4 : vector<128x128xf32>
    %cst_5 = arith.constant 0.000000e+00 : f32
    %6 = vector.broadcast %cst_5 : f32 to vector<128x128xf32>
    %7 = arith.maximumf %5, %6 : vector<128x128xf32>
    %c0_6 = arith.constant 0 : index
    %c0_7 = arith.constant 0 : index
    %8 = vector.load %arg4[%c0_6, %c0_7] : memref<128x128xf32, #tpu.memory_space<vmem>>, vector<128x128xf32>
    %cst_8 = arith.constant dense<0.000000e+00> : vector<128x128xf32>
    %9 = tpu.matmul %7, %8, %cst_8 {dimension_numbers = #tpu.dot_dimension_numbers<[1], [0], [0], [1], [0, 0, 1, 1], [], []>} : vector<128x128xf32>, vector<128x128xf32>, vector<128x128xf32> -> vector<128x128xf32>
    %c0_9 = arith.constant 0 : index
    %c0_10 = arith.constant 0 : index
    %10 = vector.load %arg5[%c0_9, %c0_10] : memref<1x128xf32, #tpu.memory_space<vmem>>, vector<1x128xf32>
    %11 = vector.broadcast %10 : vector<1x128xf32> to vector<128x128xf32>
    %12 = arith.addf %9, %11 : vector<128x128xf32>
    %c0_11 = arith.constant 0 : index
    %c0_12 = arith.constant 0 : index
    %13 = vector.load %arg6[%c0_11, %c0_12] : memref<128x128xbf16, #tpu.memory_space<vmem>>, vector<128x128xbf16>
    %14 = arith.truncf %12 : vector<128x128xf32> to vector<128x128xbf16>
    %cst_13 = arith.constant dense<0.000000e+00> : vector<128x128xf32>
    %15 = tpu.matmul %13, %14, %cst_13 {dimension_numbers = #tpu.dot_dimension_numbers<[1], [0], [0], [1], [0, 0, 1, 1], [], []>} : vector<128x128xbf16>, vector<128x128xbf16>, vector<128x128xf32> -> vector<128x128xf32>
    %16 = arith.subf %15, %12 : vector<128x128xf32>
    %17 = arith.mulf %16, %16 : vector<128x128xf32>
    %cst_14 = arith.constant dense<0.000000e+00> : vector<128xf32>
    %18 = vector.multi_reduction <add>, %17, %cst_14 [1] : vector<128x128xf32> to vector<128xf32>
    %19 = vector.shape_cast %18 : vector<128xf32> to vector<128x1xf32>
    %cst_15 = arith.constant 1.000000e-30 : f32
    %20 = vector.broadcast %cst_15 : f32 to vector<128x1xf32>
    %21 = arith.addf %19, %20 : vector<128x1xf32>
    %22 = math.rsqrt %21 : vector<128x1xf32>
    %cst_16 = arith.constant 5.000000e-01 : f32
    %23 = vector.broadcast %cst_16 : f32 to vector<128x1xf32>
    %24 = arith.mulf %23, %22 : vector<128x1xf32>
    %cst_17 = arith.constant 1.000000e+00 : f32
    %25 = vector.broadcast %cst_17 : f32 to vector<128x1xf32>
    %26 = arith.subf %25, %24 : vector<128x1xf32>
    %cst_18 = arith.constant 0.000000e+00 : f32
    %27 = vector.broadcast %cst_18 : f32 to vector<128x1xf32>
    %28 = arith.maximumf %26, %27 : vector<128x1xf32>
    %29 = vector.broadcast %28 : vector<128x1xf32> to vector<128x128xf32>
    %30 = arith.mulf %29, %16 : vector<128x128xf32>
    %31 = arith.addf %12, %30 : vector<128x128xf32>
    %32 = arith.truncf %31 : vector<128x128xf32> to vector<128x128xbf16>
    %cst_19 = arith.constant dense<0.000000e+00> : vector<128x128xf32>
    %33 = tpu.matmul %13, %32, %cst_19 {dimension_numbers = #tpu.dot_dimension_numbers<[1], [0], [0], [1], [0, 0, 1, 1], [], []>} : vector<128x128xbf16>, vector<128x128xbf16>, vector<128x128xf32> -> vector<128x128xf32>
    %34 = arith.subf %33, %12 : vector<128x128xf32>
    %35 = arith.mulf %34, %34 : vector<128x128xf32>
    %cst_20 = arith.constant dense<0.000000e+00> : vector<128xf32>
    %36 = vector.multi_reduction <add>, %35, %cst_20 [1] : vector<128x128xf32> to vector<128xf32>
    %37 = vector.shape_cast %36 : vector<128xf32> to vector<128x1xf32>
    %cst_21 = arith.constant 1.000000e-30 : f32
    %38 = vector.broadcast %cst_21 : f32 to vector<128x1xf32>
    %39 = arith.addf %37, %38 : vector<128x1xf32>
    %40 = math.rsqrt %39 : vector<128x1xf32>
    %cst_22 = arith.constant 5.000000e-01 : f32
    %41 = vector.broadcast %cst_22 : f32 to vector<128x1xf32>
    %42 = arith.mulf %41, %40 : vector<128x1xf32>
    %cst_23 = arith.constant 1.000000e+00 : f32
    %43 = vector.broadcast %cst_23 : f32 to vector<128x1xf32>
    %44 = arith.subf %43, %42 : vector<128x1xf32>
    %cst_24 = arith.constant 0.000000e+00 : f32
    %45 = vector.broadcast %cst_24 : f32 to vector<128x1xf32>
    %46 = arith.maximumf %44, %45 : vector<128x1xf32>
    %47 = vector.broadcast %46 : vector<128x1xf32> to vector<128x128xf32>
    %48 = arith.mulf %47, %34 : vector<128x128xf32>
    %49 = arith.addf %12, %48 : vector<128x128xf32>
    %50 = arith.truncf %49 : vector<128x128xf32> to vector<128x128xbf16>
    %cst_25 = arith.constant dense<0.000000e+00> : vector<128x128xf32>
    %51 = tpu.matmul %13, %50, %cst_25 {dimension_numbers = #tpu.dot_dimension_numbers<[1], [0], [0], [1], [0, 0, 1, 1], [], []>} : vector<128x128xbf16>, vector<128x128xbf16>, vector<128x128xf32> -> vector<128x128xf32>
    %52 = arith.subf %51, %12 : vector<128x128xf32>
    %53 = arith.mulf %52, %52 : vector<128x128xf32>
    %cst_26 = arith.constant dense<0.000000e+00> : vector<128xf32>
    %54 = vector.multi_reduction <add>, %53, %cst_26 [1] : vector<128x128xf32> to vector<128xf32>
    %55 = vector.shape_cast %54 : vector<128xf32> to vector<128x1xf32>
    %cst_27 = arith.constant 1.000000e-30 : f32
    %56 = vector.broadcast %cst_27 : f32 to vector<128x1xf32>
    %57 = arith.addf %55, %56 : vector<128x1xf32>
    %58 = math.rsqrt %57 : vector<128x1xf32>
    %cst_28 = arith.constant 5.000000e-01 : f32
    %59 = vector.broadcast %cst_28 : f32 to vector<128x1xf32>
    %60 = arith.mulf %59, %58 : vector<128x1xf32>
    %cst_29 = arith.constant 1.000000e+00 : f32
    %61 = vector.broadcast %cst_29 : f32 to vector<128x1xf32>
    %62 = arith.subf %61, %60 : vector<128x1xf32>
    %cst_30 = arith.constant 0.000000e+00 : f32
    %63 = vector.broadcast %cst_30 : f32 to vector<128x1xf32>
    %64 = arith.maximumf %62, %63 : vector<128x1xf32>
    %65 = vector.broadcast %64 : vector<128x1xf32> to vector<128x128xf32>
    %66 = arith.mulf %65, %52 : vector<128x128xf32>
    %67 = arith.addf %12, %66 : vector<128x128xf32>
    %c0_31 = arith.constant 0 : index
    %c0_32 = arith.constant 0 : index
    %68 = vector.load %arg7[%c0_31, %c0_32] : memref<128x128xf32, #tpu.memory_space<vmem>>, vector<128x128xf32>
    tpu.vector_store %arg7[%c0_31, %c0_32], %67 {strides = array<i32>} : memref<128x128xf32, #tpu.memory_space<vmem>>, vector<128x128xf32>,
    return
  }
  func.func @transform_0(%arg0: i32) -> (i32, i32) {
    %c0_i32 = arith.constant 0 : i32
    %c0_i32_0 = arith.constant 0 : i32
    %c0_i32_1 = arith.constant 0 : i32
    return %c0_i32, %c0_i32_0 : i32, i32
  }
  func.func @transform_1(%arg0: i32) -> (i32, i32) {
    %c0_i32 = arith.constant 0 : i32
    %c0_i32_0 = arith.constant 0 : i32
    %c0_i32_1 = arith.constant 0 : i32
    return %c0_i32, %c0_i32_0 : i32, i32
  }
  func.func @transform_2(%arg0: i32) -> (i32, i32) {
    %c0_i32 = arith.constant 0 : i32
    %c0_i32_0 = arith.constant 0 : i32
    %c0_i32_1 = arith.constant 0 : i32
    return %c0_i32, %c0_i32_0 : i32, i32
  }
  func.func @transform_3(%arg0: i32) -> (i32, i32) {
    %c0_i32 = arith.constant 0 : i32
    %c0_i32_0 = arith.constant 0 : i32
    %c0_i32_1 = arith.constant 0 : i32
    return %c0_i32, %c0_i32_0 : i32, i32
  }
  func.func @transform_4(%arg0: i32) -> (i32, i32) {
    %c0_i32 = arith.constant 0 : i32
    %c0_i32_0 = arith.constant 0 : i32
    %c0_i32_1 = arith.constant 0 : i32
    return %c0_i32, %c0_i32_0 : i32, i32
  }
  func.func @transform_5(%arg0: i32) -> (i32, i32) {
    %c0_i32 = arith.constant 0 : i32
    %c0_i32_0 = arith.constant 0 : i32
    %c0_i32_1 = arith.constant 0 : i32
    return %c0_i32, %c0_i32_0 : i32, i32
  }
  func.func @transform_6(%arg0: i32) -> (i32, i32) {
    %c0_i32 = arith.constant 0 : i32
    %c0_i32_0 = arith.constant 0 : i32
    %c0_i32_1 = arith.constant 0 : i32
    return %c0_i32, %c0_i32_0 : i32, i32
  }
}

</mosaic_0001>

<llo_original>
// kernel: _airgnn_apply.1
$region0: #{_airgnn_apply.1}
  #allocation0 [shape = 'u32[]', space=smem, size = 0x4, offset = 0x4, fixed_abs, tag = 'smem constant byte address 0x4 - core index']
  #allocation1 [shape = 'u32[144,128]{1,0:T(1,128)}', space=vmem, size = 0x12000, scoped, tag = 'internal scratch']
  %s0 = inlined_call_operand.vmem [shape: f32[128,128], index: 0, kind: input, shape index: {}]
  %s1 = inlined_call_operand.vmem [shape: f32[128,128], index: 1, kind: input, shape index: {}]
  %s2 = inlined_call_operand.vmem [shape: f32[1,128], index: 2, kind: input, shape index: {}]
  %s3 = inlined_call_operand.vmem [shape: f32[128,128], index: 3, kind: input, shape index: {}]
  %s4 = inlined_call_operand.vmem [shape: f32[1,128], index: 4, kind: input, shape index: {}]
  %s5 = inlined_call_operand.hbm [shape: bf16[128,128], index: 5, kind: input, shape index: {}]
  %s6 = inlined_call_operand.vmem [shape: f32[128,128], index: 6, kind: output, shape index: {}]
  %s7 = sld [smem:[#allocation0]]
  $region38: #{_airgnn_apply.1} parent=0
    _
  %s9 = ssub.s32 1, %s7
  %s10 = scalar_select 0, %s9, %s7
  $region1: #{_airgnn_apply.1} parent=0
    #allocation2 [shape = 'u8[32768]{0}', space=vmem, size = 0x8000, scoped, tag = 'input window, operand 5, single buffered']
    #allocation3 [shape = 's32[1]{0}', space=sflag, size = 0x4, scoped, tag = 'scoped memory for _airgnn_apply.1']
    %11 = vsyncpa [#allocation3], 0
    // Predicated region
    $region2: #{_airgnn_apply.1} parent=1 // pred_check
      _
    $region3: #{_airgnn_apply.1} parent=1 // pred_check_branch
      %13 = sbr.rel (0) target = $region5
    $region4: #{_airgnn_apply.1} parent=1 // pred_region
      _
    $region5: #{_airgnn_apply.1} parent=1 // pred_fallthru
      _
    // Predicated region
    $region6: #{_airgnn_apply.1} parent=1 // pred_check
      _
    $region7: #{_airgnn_apply.1} parent=1 // pred_check_branch
      %15 = sbr.rel (0) target = $region9
    $region8: #{_airgnn_apply.1} parent=1 // pred_region
      _
    $region9: #{_airgnn_apply.1} parent=1 // pred_fallthru
      _
    // Predicated region
    $region10: #{_airgnn_apply.1} parent=1 // pred_check
      _
    $region11: #{_airgnn_apply.1} parent=1 // pred_check_branch
      %17 = sbr.rel (0) target = $region13
    $region12: #{_airgnn_apply.1} parent=1 // pred_region
      _
    $region13: #{_airgnn_apply.1} parent=1 // pred_fallthru
      _
    // Predicated region
    $region14: #{_airgnn_apply.1} parent=1 // pred_check
      _
    $region15: #{_airgnn_apply.1} parent=1 // pred_check_branch
      %19 = sbr.rel (0) target = $region17
    $region16: #{_airgnn_apply.1} parent=1 // pred_region
      _
    $region17: #{_airgnn_apply.1} parent=1 // pred_fallthru
      _
    // Predicated region
    $region18: #{_airgnn_apply.1} parent=1 // pred_check
      _
    $region19: #{_airgnn_apply.1} parent=1 // pred_check_branch
      %21 = sbr.rel (0) target = $region21
    $region20: #{_airgnn_apply.1} parent=1 // pred_region
      _
    $region21: #{_airgnn_apply.1} parent=1 // pred_fallthru
      _
    // Predicated region
    $region22: #{_airgnn_apply.1} parent=1 // pred_check
      _
    $region23: #{_airgnn_apply.1} parent=1 // pred_check_branch
      %23 = sbr.rel (0) target = $region25
    $region24: #{_airgnn_apply.1} parent=1 // pred_region
      %s25 = ssub.s32 1024, 1024
      %26 = vsyncadd [#allocation3], %s25
      %s27 = sshll.u32 [#allocation2], 4
      %s28 = int_to_ptr.vmem [resolvable:$true] %s27
      %33 = dma.hbm_to_vmem [thread:$0]  %s5, 1024, %s28, [#allocation3], 64, 64, 4
    $region25: #{_airgnn_apply.1} parent=1 // pred_fallthru
      _
    // Predicated region
    $region26: #{_airgnn_apply.1} parent=1 // pred_check
      _
    $region27: #{_airgnn_apply.1} parent=1 // pred_check_branch
      %35 = sbr.rel (0) target = $region29
    $region28: #{_airgnn_apply.1} parent=1 // pred_region
      %36 = dma.done [#allocation3], 1024
    $region29: #{_airgnn_apply.1} parent=1 // pred_fallthru
      _
    %v38 = vld [vmem:[%s0] sm:$0xff]
    %v39 = vld [vmem:[%s0 + $0x8] sm:$0xff]
    %v40 = vld [vmem:[%s0 + $0x10] sm:$0xff]
    %v41 = vld [vmem:[%s0 + $0x18] sm:$0xff]
    %v42 = vld [vmem:[%s0 + $0x20] sm:$0xff]
    %v43 = vld [vmem:[%s0 + $0x28] sm:$0xff]
    %v44 = vld [vmem:[%s0 + $0x30] sm:$0xff]
    %v45 = vld [vmem:[%s0 + $0x38] sm:$0xff]
    %v46 = vld [vmem:[%s0 + $0x40] sm:$0xff]
    %v47 = vld [vmem:[%s0 + $0x48] sm:$0xff]
    %v48 = vld [vmem:[%s0 + $0x50] sm:$0xff]
    %v49 = vld [vmem:[%s0 + $0x58] sm:$0xff]
    %v50 = vld [vmem:[%s0 + $0x60] sm:$0xff]
    %v51 = vld [vmem:[%s0 + $0x68] sm:$0xff]
    %v52 = vld [vmem:[%s0 + $0x70] sm:$0xff]
    %v53 = vld [vmem:[%s0 + $0x78] sm:$0xff]
    %v54 = vld [vmem:[%s1] sm:$0xff]
    %v55 = vld [vmem:[%s1 + $0x8] sm:$0xff]
    %v56 = vld [vmem:[%s1 + $0x10] sm:$0xff]
    %v57 = vld [vmem:[%s1 + $0x18] sm:$0xff]
    %v58 = vld [vmem:[%s1 + $0x20] sm:$0xff]
    %v59 = vld [vmem:[%s1 + $0x28] sm:$0xff]
    %v60 = vld [vmem:[%s1 + $0x30] sm:$0xff]
    %v61 = vld [vmem:[%s1 + $0x38] sm:$0xff]
    %v62 = vld [vmem:[%s1 + $0x40] sm:$0xff]
    %v63 = vld [vmem:[%s1 + $0x48] sm:$0xff]
    %v64 = vld [vmem:[%s1 + $0x50] sm:$0xff]
    %v65 = vld [vmem:[%s1 + $0x58] sm:$0xff]
    %v66 = vld [vmem:[%s1 + $0x60] sm:$0xff]
    %v67 = vld [vmem:[%s1 + $0x68] sm:$0xff]
    %v68 = vld [vmem:[%s1 + $0x70] sm:$0xff]
    %v69 = vld [vmem:[%s1 + $0x78] sm:$0xff]
    %v70 = vld [vmem:[%s2] sm:$0x1]
    %v72 = vlaneseq
    %v73 = vshrl.u32 %v72, 7
    %v74 = vsub.s32 0, %v73
    %v75 = vrot.slane %v70, %v74
    %77 = vmatprep.subr.mxu0 0.0
    %78 = vmatpush1.msra.mxu0 %v54
    %79 = vmatprep.subr.mxu0 0.0
    %80 = vmatpush1.msra.mxu0 %v55
    %81 = vmatprep.subr.mxu0 0.0
    %82 = vmatpush1.msra.mxu0 %v56
    %83 = vmatprep.subr.mxu0 0.0
    %84 = vmatpush1.msra.mxu0 %v57
    %85 = vmatprep.subr.mxu0 0.0
    %86 = vmatpush1.msra.mxu0 %v58
    %87 = vmatprep.subr.mxu0 0.0
    %88 = vmatpush1.msra.mxu0 %v59
    %89 = vmatprep.subr.mxu0 0.0
    %90 = vmatpush1.msra.mxu0 %v60
    %91 = vmatprep.subr.mxu0 0.0
    %92 = vmatpush1.msra.mxu0 %v61
    %93 = vmatprep.subr.mxu0 0.0
    %94 = vmatpush1.msra.mxu0 %v62
    %95 = vmatprep.subr.mxu0 0.0
    %96 = vmatpush1.msra.mxu0 %v63
    %97 = vmatprep.subr.mxu0 0.0
    %98 = vmatpush1.msra.mxu0 %v64
    %99 = vmatprep.subr.mxu0 0.0
    %100 = vmatpush1.msra.mxu0 %v65
    %101 = vmatprep.subr.mxu0 0.0
    %102 = vmatpush1.msra.mxu0 %v66
    %103 = vmatprep.subr.mxu0 0.0
    %104 = vmatpush1.msra.mxu0 %v67
    %105 = vmatprep.subr.mxu0 0.0
    %106 = vmatpush1.msra.mxu0 %v68
    %107 = vmatprep.subr.mxu0 0.0
    %108 = vmatpush1.msra.mxu0 %v69
    %109 = vmatprep.subr.mxu0 0.0
    %110 = vmatpush1.msra.mxu0 0.0
    %111 = vmatprep.subr.mxu0 0.0
    %112 = vmatpush1.msra.mxu0 0.0
    %113 = vmatprep.subr.mxu0 0.0
    %114 = vmatpush1.msra.mxu0 0.0
    %115 = vmatprep.subr.mxu0 0.0
    %116 = vmatpush1.msra.mxu0 0.0
    %117 = vmatprep.subr.mxu0 0.0
    %118 = vmatpush1.msra.mxu0 0.0
    %119 = vmatprep.subr.mxu0 0.0
    %120 = vmatpush1.msra.mxu0 0.0
    %121 = vmatprep.subr.mxu0 0.0
    %122 = vmatpush1.msra.mxu0 0.0
    %123 = vmatprep.subr.mxu0 0.0
    %124 = vmatpush1.msra.mxu0 0.0
    %125 = vmatprep.subr.mxu0 0.0
    %126 = vmatpush1.msra.mxu0 0.0
    %127 = vmatprep.subr.mxu0 0.0
    %128 = vmatpush1.msra.mxu0 0.0
    %129 = vmatprep.subr.mxu0 0.0
    %130 = vmatpush1.msra.mxu0 0.0
    %131 = vmatprep.subr.mxu0 0.0
    %132 = vmatpush1.msra.mxu0 0.0
    %133 = vmatprep.subr.mxu0 0.0
    %134 = vmatpush1.msra.mxu0 0.0
    %135 = vmatprep.subr.mxu0 0.0
    %136 = vmatpush1.msra.mxu0 0.0
    %137 = vmatprep.subr.mxu0 0.0
    %138 = vmatpush1.msra.mxu0 0.0
    %139 = vmatprep.subr.mxu0 0.0
    %140 = vmatpush1.msra.mxu0 0.0
    %141 = vmatprep.mubr.f32.mxu0 0.0
    %142 = vmatmul.mubr.f32.gmra.mrb[0].mxu0 %v38
    %v143 = vpop.f32.mrb[0].mxu0
    %v144 = vadd.f32 %v75, %v143
    %v145 = vpop.f32.mrb[0].mxu0
    %146 = vmatprep.mubr.f32.mxu0 0.0
    %147 = vmatmul.mubr.f32.gmra.mrb[0].mxu0 %v39
    %v148 = vpop.f32.mrb[0].mxu0
    %v149 = vadd.f32 %v75, %v148
    %v150 = vpop.f32.mrb[0].mxu0
    %151 = vmatprep.mubr.f32.mxu0 0.0
    %152 = vmatmul.mubr.f32.gmra.mrb[0].mxu0 %v40
    %v153 = vpop.f32.mrb[0].mxu0
    %v154 = vadd.f32 %v75, %v153
    %v155 = vpop.f32.mrb[0].mxu0
    %156 = vmatprep.mubr.f32.mxu0 0.0
    %157 = vmatmul.mubr.f32.gmra.mrb[0].mxu0 %v41
    %v158 = vpop.f32.mrb[0].mxu0
    %v159 = vadd.f32 %v75, %v158
    %v160 = vpop.f32.mrb[0].mxu0
    %161 = vmatprep.mubr.f32.mxu0 0.0
    %162 = vmatmul.mubr.f32.gmra.mrb[0].mxu0 %v42
    %v163 = vpop.f32.mrb[0].mxu0
    %v164 = vadd.f32 %v75, %v163
    %v165 = vpop.f32.mrb[0].mxu0
    %166 = vmatprep.mubr.f32.mxu0 0.0
    %167 = vmatmul.mubr.f32.gmra.mrb[0].mxu0 %v43
    %v168 = vpop.f32.mrb[0].mxu0
    %v169 = vadd.f32 %v75, %v168
    %v170 = vpop.f32.mrb[0].mxu0
    %171 = vmatprep.mubr.f32.mxu0 0.0
    %172 = vmatmul.mubr.f32.gmra.mrb[0].mxu0 %v44
    %v173 = vpop.f32.mrb[0].mxu0
    %v174 = vadd.f32 %v75, %v173
    %v175 = vpop.f32.mrb[0].mxu0
    %176 = vmatprep.mubr.f32.mxu0 0.0
    %177 = vmatmul.mubr.f32.gmra.mrb[0].mxu0 %v45
    %v178 = vpop.f32.mrb[0].mxu0
    %v179 = vadd.f32 %v75, %v178
    %v180 = vpop.f32.mrb[0].mxu0
    %181 = vmatprep.mubr.f32.mxu0 0.0
    %182 = vmatmul.mubr.f32.gmra.mrb[0].mxu0 %v46
    %v183 = vpop.f32.mrb[0].mxu0
    %v184 = vadd.f32 %v75, %v183
    %v185 = vpop.f32.mrb[0].mxu0
    %186 = vmatprep.mubr.f32.mxu0 0.0
    %187 = vmatmul.mubr.f32.gmra.mrb[0].mxu0 %v47
    %v188 = vpop.f32.mrb[0].mxu0
    %v189 = vadd.f32 %v75, %v188
    %v190 = vpop.f32.mrb[0].mxu0
    %191 = vmatprep.mubr.f32.mxu0 0.0
    %192 = vmatmul.mubr.f32.gmra.mrb[0].mxu0 %v48
    %v193 = vpop.f32.mrb[0].mxu0
    %v194 = vadd.f32 %v75, %v193
    %v195 = vpop.f32.mrb[0].mxu0
    %196 = vmatprep.mubr.f32.mxu0 0.0
    %197 = vmatmul.mubr.f32.gmra.mrb[0].mxu0 %v49
    %v198 = vpop.f32.mrb[0].mxu0
    %v199 = vadd.f32 %v75, %v198
    %v200 = vpop.f32.mrb[0].mxu0
    %201 = vmatprep.mubr.f32.mxu0 0.0
    %202 = vmatmul.mubr.f32.gmra.mrb[0].mxu0 %v50
    %v203 = vpop.f32.mrb[0].mxu0
    %v204 = vadd.f32 %v75, %v203
    %v205 = vpop.f32.mrb[0].mxu0
    %206 = vmatprep.mubr.f32.mxu0 0.0
    %207 = vmatmul.mubr.f32.gmra.mrb[0].mxu0 %v51
    %v208 = vpop.f32.mrb[0].mxu0
    %v209 = vadd.f32 %v75, %v208
    %v210 = vpop.f32.mrb[0].mxu0
    %211 = vmatprep.mubr.f32.mxu0 0.0
    %212 = vmatmul.mubr.f32.gmra.mrb[0].mxu0 %v52
    %v213 = vpop.f32.mrb[0].mxu0
    %v214 = vadd.f32 %v75, %v213
    %v215 = vpop.f32.mrb[0].mxu0
    %216 = vmatprep.mubr.f32.mxu0 0.0
    %217 = vmatmul.mubr.f32.gmra.mrb[0].mxu0 %v53
    %v218 = vpop.f32.mrb[0].mxu0
    %v219 = vadd.f32 %v75, %v218
    %v220 = vpop.f32.mrb[0].mxu0
    %221 = vdwg.mxu0
    %v222 = vmax.f32 %v144, 0.0
    %v223 = vmax.f32 %v149, 0.0
    %v224 = vmax.f32 %v154, 0.0
    %v225 = vmax.f32 %v159, 0.0
    %v226 = vmax.f32 %v164, 0.0
    %v227 = vmax.f32 %v169, 0.0
    %v228 = vmax.f32 %v174, 0.0
    %v229 = vmax.f32 %v179, 0.0
    %v230 = vmax.f32 %v184, 0.0
    %v231 = vmax.f32 %v189, 0.0
    %v232 = vmax.f32 %v194, 0.0
    %v233 = vmax.f32 %v199, 0.0
    %v234 = vmax.f32 %v204, 0.0
    %v235 = vmax.f32 %v209, 0.0
    %v236 = vmax.f32 %v214, 0.0
    %v237 = vmax.f32 %v219, 0.0
    %v238 = vld [vmem:[%s3] sm:$0xff]
    %v239 = vld [vmem:[%s3 + $0x8] sm:$0xff]
    %v240 = vld [vmem:[%s3 + $0x10] sm:$0xff]
    %v241 = vld [vmem:[%s3 + $0x18] sm:$0xff]
    %v242 = vld [vmem:[%s3 + $0x20] sm:$0xff]
    %v243 = vld [vmem:[%s3 + $0x28] sm:$0xff]
    %v244 = vld [vmem:[%s3 + $0x30] sm:$0xff]
    %v245 = vld [vmem:[%s3 + $0x38] sm:$0xff]
    %v246 = vld [vmem:[%s3 + $0x40] sm:$0xff]
    %v247 = vld [vmem:[%s3 + $0x48] sm:$0xff]
    %v248 = vld [vmem:[%s3 + $0x50] sm:$0xff]
    %v249 = vld [vmem:[%s3 + $0x58] sm:$0xff]
    %v250 = vld [vmem:[%s3 + $0x60] sm:$0xff]
    %v251 = vld [vmem:[%s3 + $0x68] sm:$0xff]
    %v252 = vld [vmem:[%s3 + $0x70] sm:$0xff]
    %v253 = vld [vmem:[%s3 + $0x78] sm:$0xff]
    %v254 = vld [vmem:[%s4] sm:$0x1]
    %v256 = vlaneseq
    %v257 = vshrl.u32 %v256, 7
    %v258 = vsub.s32 0, %v257
    %v259 = vrot.slane %v254, %v258
    %261 = vmatprep.subr.mxu0 0.0
    %262 = vmatpush1.msra.mxu0 %v238
    %263 = vmatprep.subr.mxu0 0.0
    %264 = vmatpush1.msra.mxu0 %v239
    %265 = vmatprep.subr.mxu0 0.0
    %266 = vmatpush1.msra.mxu0 %v240
    %267 = vmatprep.subr.mxu0 0.0
    %268 = vmatpush1.msra.mxu0 %v241
    %269 = vmatprep.subr.mxu0 0.0
    %270 = vmatpush1.msra.mxu0 %v242
    %271 = vmatprep.subr.mxu0 0.0
    %272 = vmatpush1.msra.mxu0 %v243
    %273 = vmatprep.subr.mxu0 0.0
    %274 = vmatpush1.msra.mxu0 %v244
    %275 = vmatprep.subr.mxu0 0.0
    %276 = vmatpush1.msra.mxu0 %v245
    %277 = vmatprep.subr.mxu0 0.0
    %278 = vmatpush1.msra.mxu0 %v246
    %279 = vmatprep.subr.mxu0 0.0
    %280 = vmatpush1.msra.mxu0 %v247
    %281 = vmatprep.subr.mxu0 0.0
    %282 = vmatpush1.msra.mxu0 %v248
    %283 = vmatprep.subr.mxu0 0.0
    %284 = vmatpush1.msra.mxu0 %v249
    %285 = vmatprep.subr.mxu0 0.0
    %286 = vmatpush1.msra.mxu0 %v250
    %287 = vmatprep.subr.mxu0 0.0
    %288 = vmatpush1.msra.mxu0 %v251
    %289 = vmatprep.subr.mxu0 0.0
    %290 = vmatpush1.msra.mxu0 %v252
    %291 = vmatprep.subr.mxu0 0.0
    %292 = vmatpush1.msra.mxu0 %v253
    %293 = vmatprep.subr.mxu0 0.0
    %294 = vmatpush1.msra.mxu0 0.0
    %295 = vmatprep.subr.mxu0 0.0
    %296 = vmatpush1.msra.mxu0 0.0
    %297 = vmatprep.subr.mxu0 0.0
    %298 = vmatpush1.msra.mxu0 0.0
    %299 = vmatprep.subr.mxu0 0.0
    %300 = vmatpush1.msra.mxu0 0.0
    %301 = vmatprep.subr.mxu0 0.0
    %302 = vmatpush1.msra.mxu0 0.0
    %303 = vmatprep.subr.mxu0 0.0
    %304 = vmatpush1.msra.mxu0 0.0
    %305 = vmatprep.subr.mxu0 0.0
    %306 = vmatpush1.msra.mxu0 0.0
    %307 = vmatprep.subr.mxu0 0.0
    %308 = vmatpush1.msra.mxu0 0.0
    %309 = vmatprep.subr.mxu0 0.0
    %310 = vmatpush1.msra.mxu0 0.0
    %311 = vmatprep.subr.mxu0 0.0
    %312 = vmatpush1.msra.mxu0 0.0
    %313 = vmatprep.subr.mxu0 0.0
    %314 = vmatpush1.msra.mxu0 0.0
    %315 = vmatprep.subr.mxu0 0.0
    %316 = vmatpush1.msra.mxu0 0.0
    %317 = vmatprep.subr.mxu0 0.0
    %318 = vmatpush1.msra.mxu0 0.0
    %319 = vmatprep.subr.mxu0 0.0
    %320 = vmatpush1.msra.mxu0 0.0
    %321 = vmatprep.subr.mxu0 0.0
    %322 = vmatpush1.msra.mxu0 0.0
    %323 = vmatprep.subr.mxu0 0.0
    %324 = vmatpush1.msra.mxu0 0.0
    %325 = vmatprep.mubr.f32.mxu0 0.0
    %326 = vmatmul.mubr.f32.gmra.mrb[0].mxu0 %v222
    %v327 = vpop.f32.mrb[0].mxu0
    %v328 = vadd.f32 %v259, %v327
    %v329 = vpop.f32.mrb[0].mxu0
    %330 = vmatprep.mubr.f32.mxu0 0.0
    %331 = vmatmul.mubr.f32.gmra.mrb[0].mxu0 %v223
    %v332 = vpop.f32.mrb[0].mxu0
    %v333 = vadd.f32 %v259, %v332
    %v334 = vpop.f32.mrb[0].mxu0
    %335 = vmatprep.mubr.f32.mxu0 0.0
    %336 = vmatmul.mubr.f32.gmra.mrb[0].mxu0 %v224
    %v337 = vpop.f32.mrb[0].mxu0
    %v338 = vadd.f32 %v259, %v337
    %v339 = vpop.f32.mrb[0].mxu0
    %340 = vmatprep.mubr.f32.mxu0 0.0
    %341 = vmatmul.mubr.f32.gmra.mrb[0].mxu0 %v225
    %v342 = vpop.f32.mrb[0].mxu0
    %v343 = vadd.f32 %v259, %v342
    %v344 = vpop.f32.mrb[0].mxu0
    %345 = vmatprep.mubr.f32.mxu0 0.0
    %346 = vmatmul.mubr.f32.gmra.mrb[0].mxu0 %v226
    %v347 = vpop.f32.mrb[0].mxu0
    %v348 = vadd.f32 %v259, %v347
    %v349 = vpop.f32.mrb[0].mxu0
    %350 = vmatprep.mubr.f32.mxu0 0.0
    %351 = vmatmul.mubr.f32.gmra.mrb[0].mxu0 %v227
    %v352 = vpop.f32.mrb[0].mxu0
    %v353 = vadd.f32 %v259, %v352
    %v354 = vpop.f32.mrb[0].mxu0
    %355 = vmatprep.mubr.f32.mxu0 0.0
    %356 = vmatmul.mubr.f32.gmra.mrb[0].mxu0 %v228
    %v357 = vpop.f32.mrb[0].mxu0
    %v358 = vadd.f32 %v259, %v357
    %v359 = vpop.f32.mrb[0].mxu0
    %360 = vmatprep.mubr.f32.mxu0 0.0
    %361 = vmatmul.mubr.f32.gmra.mrb[0].mxu0 %v229
    %v362 = vpop.f32.mrb[0].mxu0
    %v363 = vadd.f32 %v259, %v362
    %v364 = vpop.f32.mrb[0].mxu0
    %365 = vmatprep.mubr.f32.mxu0 0.0
    %366 = vmatmul.mubr.f32.gmra.mrb[0].mxu0 %v230
    %v367 = vpop.f32.mrb[0].mxu0
    %v368 = vadd.f32 %v259, %v367
    %v369 = vpop.f32.mrb[0].mxu0
    %370 = vmatprep.mubr.f32.mxu0 0.0
    %371 = vmatmul.mubr.f32.gmra.mrb[0].mxu0 %v231
    %v372 = vpop.f32.mrb[0].mxu0
    %v373 = vadd.f32 %v259, %v372
    %v374 = vpop.f32.mrb[0].mxu0
    %375 = vmatprep.mubr.f32.mxu0 0.0
    %376 = vmatmul.mubr.f32.gmra.mrb[0].mxu0 %v232
    %v377 = vpop.f32.mrb[0].mxu0
    %v378 = vadd.f32 %v259, %v377
    %v379 = vpop.f32.mrb[0].mxu0
    %380 = vmatprep.mubr.f32.mxu0 0.0
    %381 = vmatmul.mubr.f32.gmra.mrb[0].mxu0 %v233
    %v382 = vpop.f32.mrb[0].mxu0
    %v383 = vadd.f32 %v259, %v382
    %v384 = vpop.f32.mrb[0].mxu0
    %385 = vmatprep.mubr.f32.mxu0 0.0
    %386 = vmatmul.mubr.f32.gmra.mrb[0].mxu0 %v234
    %v387 = vpop.f32.mrb[0].mxu0
    %v388 = vadd.f32 %v259, %v387
    %v389 = vpop.f32.mrb[0].mxu0
    %390 = vmatprep.mubr.f32.mxu0 0.0
    %391 = vmatmul.mubr.f32.gmra.mrb[0].mxu0 %v235
    %v392 = vpop.f32.mrb[0].mxu0
    %v393 = vadd.f32 %v259, %v392
    %v394 = vpop.f32.mrb[0].mxu0
    %395 = vmatprep.mubr.f32.mxu0 0.0
    %396 = vmatmul.mubr.f32.gmra.mrb[0].mxu0 %v236
    %v397 = vpop.f32.mrb[0].mxu0
    %v398 = vadd.f32 %v259, %v397
    %v399 = vpop.f32.mrb[0].mxu0
    %400 = vmatprep.mubr.f32.mxu0 0.0
    %401 = vmatmul.mubr.f32.gmra.mrb[0].mxu0 %v237
    %v402 = vpop.f32.mrb[0].mxu0
    %v403 = vadd.f32 %v259, %v402
    %v404 = vpop.f32.mrb[0].mxu0
    %405 = vdwg.mxu0
    %v406 = vld [vmem:[#allocation2] sm:$0xf]
    %v407 = vld [vmem:[#allocation2 + $0x4] sm:$0xf]
    %v408 = vld [vmem:[#allocation2 + $0x8] sm:$0xf]
    %v409 = vld [vmem:[#allocation2 + $0xc] sm:$0xf]
    %v410 = vld [vmem:[#allocation2 + $0x10] sm:$0xf]
    %v411 = vld [vmem:[#allocation2 + $0x14] sm:$0xf]
    %v412 = vld [vmem:[#allocation2 + $0x18] sm:$0xf]
    %v413 = vld [vmem:[#allocation2 + $0x1c] sm:$0xf]
    %v414 = vld [vmem:[#allocation2 + $0x20] sm:$0xf]
    %v415 = vld [vmem:[#allocation2 + $0x24] sm:$0xf]
    %v416 = vld [vmem:[#allocation2 + $0x28] sm:$0xf]
    %v417 = vld [vmem:[#allocation2 + $0x2c] sm:$0xf]
    %v418 = vld [vmem:[#allocation2 + $0x30] sm:$0xf]
    %v419 = vld [vmem:[#allocation2 + $0x34] sm:$0xf]
    %v420 = vld [vmem:[#allocation2 + $0x38] sm:$0xf]
    %v421 = vld [vmem:[#allocation2 + $0x3c] sm:$0xf]
    %v422 = vpack.c.bf16 %v333, %v328
    %v423 = vpack.c.bf16 %v343, %v338
    %v424 = vpack.c.bf16 %v353, %v348
    %v425 = vpack.c.bf16 %v363, %v358
    %v426 = vpack.c.bf16 %v373, %v368
    %v427 = vpack.c.bf16 %v383, %v378
    %v428 = vpack.c.bf16 %v393, %v388
    %v429 = vpack.c.bf16 %v403, %v398
    %v446 = vunpack.c.l.b16 %v406
    %v447 = vunpack.c.l.b16 %v407
    %v448 = vunpack.c.l.b16 %v408
    %v449 = vunpack.c.l.b16 %v409
    %v450 = vunpack.c.l.b16 %v410
    %v451 = vunpack.c.l.b16 %v411
    %v452 = vunpack.c.l.b16 %v412
    %v453 = vunpack.c.l.b16 %v413
    %v454 = vunpack.c.l.b16 %v414
    %v455 = vunpack.c.l.b16 %v415
    %v456 = vunpack.c.l.b16 %v416
    %v457 = vunpack.c.l.b16 %v417
    %v458 = vunpack.c.l.b16 %v418
    %v459 = vunpack.c.l.b16 %v419
    %v460 = vunpack.c.l.b16 %v420
    %v461 = vunpack.c.l.b16 %v421
    %v462 = vpack.c.b16 %v447, %v446
    %v463 = vpack.c.b16 %v449, %v448
    %v464 = vpack.c.b16 %v451, %v450
    %v465 = vpack.c.b16 %v453, %v452
    %v466 = vpack.c.b16 %v455, %v454
    %v467 = vpack.c.b16 %v457, %v456
    %v468 = vpack.c.b16 %v459, %v458
    %v469 = vpack.c.b16 %v461, %v460
    %478 = vmatprep.subr.bf16.mxu0 0
    %479 = vmatpush1.bf16.msra.mxu0 %v422
    %480 = vmatprep.subr.bf16.mxu0 0
    %481 = vmatpush1.bf16.msra.mxu0 %v423
    %482 = vmatprep.subr.bf16.mxu0 0
    %483 = vmatpush1.bf16.msra.mxu0 %v424
    %484 = vmatprep.subr.bf16.mxu0 0
    %485 = vmatpush1.bf16.msra.mxu0 %v425
    %486 = vmatprep.subr.bf16.mxu0 0
    %487 = vmatpush1.bf16.msra.mxu0 %v426
    %488 = vmatprep.subr.bf16.mxu0 0
    %489 = vmatpush1.bf16.msra.mxu0 %v427
    %490 = vmatprep.subr.bf16.mxu0 0
    %491 = vmatpush1.bf16.msra.mxu0 %v428
    %492 = vmatprep.subr.bf16.mxu0 0
    %493 = vmatpush1.bf16.msra.mxu0 %v429
    %494 = vmatprep.subr.bf16.mxu0 0
    %495 = vmatpush1.bf16.msra.mxu0 0
    %496 = vmatprep.subr.bf16.mxu0 0
    %497 = vmatpush1.bf16.msra.mxu0 0
    %498 = vmatprep.subr.bf16.mxu0 0
    %499 = vmatpush1.bf16.msra.mxu0 0
    %500 = vmatprep.subr.bf16.mxu0 0
    %501 = vmatpush1.bf16.msra.mxu0 0
    %502 = vmatprep.subr.bf16.mxu0 0
    %503 = vmatpush1.bf16.msra.mxu0 0
    %504 = vmatprep.subr.bf16.mxu0 0
    %505 = vmatpush1.bf16.msra.mxu0 0
    %506 = vmatprep.subr.bf16.mxu0 0
    %507 = vmatpush1.bf16.msra.mxu0 0
    %508 = vmatprep.subr.bf16.mxu0 0
    %509 = vmatpush1.bf16.msra.mxu0 0
    %510 = vmatprep.mubr.bf16.mxu0 0
    %511 = vmatmul.mubr.bf16.gmra.mrb[0].mxu0 %v462
    %v512 = vpop.f32.mrb[0].mxu0
    %v513 = vadd.f32 0.0, %v512
    %v514 = vpop.f32.mrb[0].mxu0
    %v515 = vpop.f32.mrb[0].mxu0
    %v516 = vadd.f32 0.0, %v515
    %v517 = vpop.f32.mrb[0].mxu0
    %518 = vmatprep.mubr.bf16.mxu0 0
    %519 = vmatmul.mubr.bf16.gmra.mrb[0].mxu0 %v463
    %v520 = vpop.f32.mrb[0].mxu0
    %v521 = vadd.f32 0.0, %v520
    %v522 = vpop.f32.mrb[0].mxu0
    %v523 = vpop.f32.mrb[0].mxu0
    %v524 = vadd.f32 0.0, %v523
    %v525 = vpop.f32.mrb[0].mxu0
    %526 = vmatprep.mubr.bf16.mxu0 0
    %527 = vmatmul.mubr.bf16.gmra.mrb[0].mxu0 %v464
    %v528 = vpop.f32.mrb[0].mxu0
    %v529 = vadd.f32 0.0, %v528
    %v530 = vpop.f32.mrb[0].mxu0
    %v531 = vpop.f32.mrb[0].mxu0
    %v532 = vadd.f32 0.0, %v531
    %v533 = vpop.f32.mrb[0].mxu0
    %534 = vmatprep.mubr.bf16.mxu0 0
    %535 = vmatmul.mubr.bf16.gmra.mrb[0].mxu0 %v465
    %v536 = vpop.f32.mrb[0].mxu0
    %v537 = vadd.f32 0.0, %v536
    %v538 = vpop.f32.mrb[0].mxu0
    %v539 = vpop.f32.mrb[0].mxu0
    %v540 = vadd.f32 0.0, %v539
    %v541 = vpop.f32.mrb[0].mxu0
    %542 = vmatprep.mubr.bf16.mxu0 0
    %543 = vmatmul.mubr.bf16.gmra.mrb[0].mxu0 %v466
    %v544 = vpop.f32.mrb[0].mxu0
    %v545 = vadd.f32 0.0, %v544
    %v546 = vpop.f32.mrb[0].mxu0
    %v547 = vpop.f32.mrb[0].mxu0
    %v548 = vadd.f32 0.0, %v547
    %v549 = vpop.f32.mrb[0].mxu0
    %550 = vmatprep.mubr.bf16.mxu0 0
    %551 = vmatmul.mubr.bf16.gmra.mrb[0].mxu0 %v467
    %v552 = vpop.f32.mrb[0].mxu0
    %v553 = vadd.f32 0.0, %v552
    %v554 = vpop.f32.mrb[0].mxu0
    %v555 = vpop.f32.mrb[0].mxu0
    %v556 = vadd.f32 0.0, %v555
    %v557 = vpop.f32.mrb[0].mxu0
    %558 = vmatprep.mubr.bf16.mxu0 0
    %559 = vmatmul.mubr.bf16.gmra.mrb[0].mxu0 %v468
    %v560 = vpop.f32.mrb[0].mxu0
    %v561 = vadd.f32 0.0, %v560
    %v562 = vpop.f32.mrb[0].mxu0
    %v563 = vpop.f32.mrb[0].mxu0
    %v564 = vadd.f32 0.0, %v563
    %v565 = vpop.f32.mrb[0].mxu0
    %566 = vmatprep.mubr.bf16.mxu0 0
    %567 = vmatmul.mubr.bf16.gmra.mrb[0].mxu0 %v469
    %v568 = vpop.f32.mrb[0].mxu0
    %v569 = vadd.f32 0.0, %v568
    %v570 = vpop.f32.mrb[0].mxu0
    %v571 = vpop.f32.mrb[0].mxu0
    %v572 = vadd.f32 0.0, %v571
    %v573 = vpop.f32.mrb[0].mxu0
    %574 = vdwg.mxu0
    %v575 = vsub.f32 %v513, %v328
    %v576 = vsub.f32 %v516, %v333
    %v577 = vsub.f32 %v521, %v338
    %v578 = vsub.f32 %v524, %v343
    %v579 = vsub.f32 %v529, %v348
    %v580 = vsub.f32 %v532, %v353
    %v581 = vsub.f32 %v537, %v358
    %v582 = vsub.f32 %v540, %v363
    %v583 = vsub.f32 %v545, %v368
    %v584 = vsub.f32 %v548, %v373
    %v585 = vsub.f32 %v553, %v378
    %v586 = vsub.f32 %v556, %v383
    %v587 = vsub.f32 %v561, %v388
    %v588 = vsub.f32 %v564, %v393
    %v589 = vsub.f32 %v569, %v398
    %v590 = vsub.f32 %v572, %v403
    %v591 = vmul.f32 %v575, %v575
    %v592 = vmul.f32 %v576, %v576
    %v593 = vmul.f32 %v577, %v577
    %v594 = vmul.f32 %v578, %v578
    %v595 = vmul.f32 %v579, %v579
    %v596 = vmul.f32 %v580, %v580
    %v597 = vmul.f32 %v581, %v581
    %v598 = vmul.f32 %v582, %v582
    %v599 = vmul.f32 %v583, %v583
    %v600 = vmul.f32 %v584, %v584
    %v601 = vmul.f32 %v585, %v585
    %v602 = vmul.f32 %v586, %v586
    %v603 = vmul.f32 %v587, %v587
    %v604 = vmul.f32 %v588, %v588
    %v605 = vmul.f32 %v589, %v589
    %v606 = vmul.f32 %v590, %v590
    %607 = vadd.xlane.f32.xlu0 %v591
    %v608 = vpop.xlane.xlu0 %607
    %609 = vadd.xlane.f32.xlu0 %v592
    %v610 = vpop.xlane.xlu0 %609
    %611 = vadd.xlane.f32.xlu0 %v593
    %v612 = vpop.xlane.xlu0 %611
    %613 = vadd.xlane.f32.xlu0 %v594
    %v614 = vpop.xlane.xlu0 %613
    %615 = vadd.xlane.f32.xlu0 %v595
    %v616 = vpop.xlane.xlu0 %615
    %617 = vadd.xlane.f32.xlu0 %v596
    %v618 = vpop.xlane.xlu0 %617
    %619 = vadd.xlane.f32.xlu0 %v597
    %v620 = vpop.xlane.xlu0 %619
    %621 = vadd.xlane.f32.xlu0 %v598
    %v622 = vpop.xlane.xlu0 %621
    %623 = vadd.xlane.f32.xlu0 %v599
    %v624 = vpop.xlane.xlu0 %623
    %625 = vadd.xlane.f32.xlu0 %v600
    %v626 = vpop.xlane.xlu0 %625
    %627 = vadd.xlane.f32.xlu0 %v601
    %v628 = vpop.xlane.xlu0 %627
    %629 = vadd.xlane.f32.xlu0 %v602
    %v630 = vpop.xlane.xlu0 %629
    %631 = vadd.xlane.f32.xlu0 %v603
    %v632 = vpop.xlane.xlu0 %631
    %633 = vadd.xlane.f32.xlu0 %v604
    %v634 = vpop.xlane.xlu0 %633
    %635 = vadd.xlane.f32.xlu0 %v605
    %v636 = vpop.xlane.xlu0 %635
    %637 = vadd.xlane.f32.xlu0 %v606
    %v638 = vpop.xlane.xlu0 %637
    %v639 = vadd.f32 %v608, 1e-30
    %v640 = vadd.f32 %v610, 1e-30
    %v641 = vadd.f32 %v612, 1e-30
    %v642 = vadd.f32 %v614, 1e-30
    %v643 = vadd.f32 %v616, 1e-30
    %v644 = vadd.f32 %v618, 1e-30
    %v645 = vadd.f32 %v620, 1e-30
    %v646 = vadd.f32 %v622, 1e-30
    %v647 = vadd.f32 %v624, 1e-30
    %v648 = vadd.f32 %v626, 1e-30
    %v649 = vadd.f32 %v628, 1e-30
    %v650 = vadd.f32 %v630, 1e-30
    %v651 = vadd.f32 %v632, 1e-30
    %v652 = vadd.f32 %v634, 1e-30
    %v653 = vadd.f32 %v636, 1e-30
    %v654 = vadd.f32 %v638, 1e-30
    %v655 = vrsqrt.pop %v639
    %v656 = vrsqrt.pop %v640
    %v657 = vrsqrt.pop %v641
    %v658 = vrsqrt.pop %v642
    %v659 = vrsqrt.pop %v643
    %v660 = vrsqrt.pop %v644
    %v661 = vrsqrt.pop %v645
    %v662 = vrsqrt.pop %v646
    %v663 = vrsqrt.pop %v647
    %v664 = vrsqrt.pop %v648
    %v665 = vrsqrt.pop %v649
    %v666 = vrsqrt.pop %v650
    %v667 = vrsqrt.pop %v651
    %v668 = vrsqrt.pop %v652
    %v669 = vrsqrt.pop %v653
    %v670 = vrsqrt.pop %v654
    %v671 = vmul.f32 %v655, 0.5
    %v672 = vmul.f32 %v656, 0.5
    %v673 = vmul.f32 %v657, 0.5
    %v674 = vmul.f32 %v658, 0.5
    %v675 = vmul.f32 %v659, 0.5
    %v676 = vmul.f32 %v660, 0.5
    %v677 = vmul.f32 %v661, 0.5
    %v678 = vmul.f32 %v662, 0.5
    %v679 = vmul.f32 %v663, 0.5
    %v680 = vmul.f32 %v664, 0.5
    %v681 = vmul.f32 %v665, 0.5
    %v682 = vmul.f32 %v666, 0.5
    %v683 = vmul.f32 %v667, 0.5
    %v684 = vmul.f32 %v668, 0.5
    %v685 = vmul.f32 %v669, 0.5
    %v686 = vmul.f32 %v670, 0.5
    %v687 = vsub.f32 1.0, %v671
    %v688 = vsub.f32 1.0, %v672
    %v689 = vsub.f32 1.0, %v673
    %v690 = vsub.f32 1.0, %v674
    %v691 = vsub.f32 1.0, %v675
    %v692 = vsub.f32 1.0, %v676
    %v693 = vsub.f32 1.0, %v677
    %v694 = vsub.f32 1.0, %v678
    %v695 = vsub.f32 1.0, %v679
    %v696 = vsub.f32 1.0, %v680
    %v697 = vsub.f32 1.0, %v681
    %v698 = vsub.f32 1.0, %v682
    %v699 = vsub.f32 1.0, %v683
    %v700 = vsub.f32 1.0, %v684
    %v701 = vsub.f32 1.0, %v685
    %v702 = vsub.f32 1.0, %v686
    %v703 = vmax.f32 %v687, 0.0
    %v704 = vmax.f32 %v688, 0.0
    %v705 = vmax.f32 %v689, 0.0
    %v706 = vmax.f32 %v690, 0.0
    %v707 = vmax.f32 %v691, 0.0
    %v708 = vmax.f32 %v692, 0.0
    %v709 = vmax.f32 %v693, 0.0
    %v710 = vmax.f32 %v694, 0.0
    %v711 = vmax.f32 %v695, 0.0
    %v712 = vmax.f32 %v696, 0.0
    %v713 = vmax.f32 %v697, 0.0
    %v714 = vmax.f32 %v698, 0.0
    %v715 = vmax.f32 %v699, 0.0
    %v716 = vmax.f32 %v700, 0.0
    %v717 = vmax.f32 %v701, 0.0
    %v718 = vmax.f32 %v702, 0.0
    %v719 = vmul.f32 %v703, %v575
    %v720 = vmul.f32 %v704, %v576
    %v721 = vmul.f32 %v705, %v577
    %v722 = vmul.f32 %v706, %v578
    %v723 = vmul.f32 %v707, %v579
    %v724 = vmul.f32 %v708, %v580
    %v725 = vmul.f32 %v709, %v581
    %v726 = vmul.f32 %v710, %v582
    %v727 = vmul.f32 %v711, %v583
    %v728 = vmul.f32 %v712, %v584
    %v729 = vmul.f32 %v713, %v585
    %v730 = vmul.f32 %v714, %v586
    %v731 = vmul.f32 %v715, %v587
    %v732 = vmul.f32 %v716, %v588
    %v733 = vmul.f32 %v717, %v589
    %v734 = vmul.f32 %v718, %v590
    %v735 = vadd.f32 %v328, %v719
    %v736 = vadd.f32 %v333, %v720
    %v737 = vadd.f32 %v338, %v721
    %v738 = vadd.f32 %v343, %v722
    %v739 = vadd.f32 %v348, %v723
    %v740 = vadd.f32 %v353, %v724
    %v741 = vadd.f32 %v358, %v725
    %v742 = vadd.f32 %v363, %v726
    %v743 = vadd.f32 %v368, %v727
    %v744 = vadd.f32 %v373, %v728
    %v745 = vadd.f32 %v378, %v729
    %v746 = vadd.f32 %v383, %v730
    %v747 = vadd.f32 %v388, %v731
    %v748 = vadd.f32 %v393, %v732
    %v749 = vadd.f32 %v398, %v733
    %v750 = vadd.f32 %v403, %v734
    %v751 = vpack.c.bf16 %v736, %v735
    %v752 = vpack.c.bf16 %v738, %v737
    %v753 = vpack.c.bf16 %v740, %v739
    %v754 = vpack.c.bf16 %v742, %v741
    %v755 = vpack.c.bf16 %v744, %v743
    %v756 = vpack.c.bf16 %v746, %v745
    %v757 = vpack.c.bf16 %v748, %v747
    %v758 = vpack.c.bf16 %v750, %v749
    %759 = vmatprep.subr.bf16.mxu0 0
    %760 = vmatpush1.bf16.msra.mxu0 %v751
    %761 = vmatprep.subr.bf16.mxu0 0
    %762 = vmatpush1.bf16.msra.mxu0 %v752
    %763 = vmatprep.subr.bf16.mxu0 0
    %764 = vmatpush1.bf16.msra.mxu0 %v753
    %765 = vmatprep.subr.bf16.mxu0 0
    %766 = vmatpush1.bf16.msra.mxu0 %v754
    %767 = vmatprep.subr.bf16.mxu0 0
    %768 = vmatpush1.bf16.msra.mxu0 %v755
    %769 = vmatprep.subr.bf16.mxu0 0
    %770 = vmatpush1.bf16.msra.mxu0 %v756
    %771 = vmatprep.subr.bf16.mxu0 0
    %772 = vmatpush1.bf16.msra.mxu0 %v757
    %773 = vmatprep.subr.bf16.mxu0 0
    %774 = vmatpush1.bf16.msra.mxu0 %v758
    %775 = vmatprep.subr.bf16.mxu0 0
    %776 = vmatpush1.bf16.msra.mxu0 0
    %777 = vmatprep.subr.bf16.mxu0 0
    %778 = vmatpush1.bf16.msra.mxu0 0
    %779 = vmatprep.subr.bf16.mxu0 0
    %780 = vmatpush1.bf16.msra.mxu0 0
    %781 = vmatprep.subr.bf16.mxu0 0
    %782 = vmatpush1.bf16.msra.mxu0 0
    %783 = vmatprep.subr.bf16.mxu0 0
    %784 = vmatpush1.bf16.msra.mxu0 0
    %785 = vmatprep.subr.bf16.mxu0 0
    %786 = vmatpush1.bf16.msra.mxu0 0
    %787 = vmatprep.subr.bf16.mxu0 0
    %788 = vmatpush1.bf16.msra.mxu0 0
    %789 = vmatprep.subr.bf16.mxu0 0
    %790 = vmatpush1.bf16.msra.mxu0 0
    %791 = vmatprep.mubr.bf16.mxu0 0
    %792 = vmatmul.mubr.bf16.gmra.mrb[0].mxu0 %v462
    %v793 = vpop.f32.mrb[0].mxu0
    %v794 = vadd.f32 0.0, %v793
    %v795 = vpop.f32.mrb[0].mxu0
    %v796 = vpop.f32.mrb[0].mxu0
    %v797 = vadd.f32 0.0, %v796
    %v798 = vpop.f32.mrb[0].mxu0
    %799 = vmatprep.mubr.bf16.mxu0 0
    %800 = vmatmul.mubr.bf16.gmra.mrb[0].mxu0 %v463
    %v801 = vpop.f32.mrb[0].mxu0
    %v802 = vadd.f32 0.0, %v801
    %v803 = vpop.f32.mrb[0].mxu0
    %v804 = vpop.f32.mrb[0].mxu0
    %v805 = vadd.f32 0.0, %v804
    %v806 = vpop.f32.mrb[0].mxu0
    %807 = vmatprep.mubr.bf16.mxu0 0
    %808 = vmatmul.mubr.bf16.gmra.mrb[0].mxu0 %v464
    %v809 = vpop.f32.mrb[0].mxu0
    %v810 = vadd.f32 0.0, %v809
    %v811 = vpop.f32.mrb[0].mxu0
    %v812 = vpop.f32.mrb[0].mxu0
    %v813 = vadd.f32 0.0, %v812
    %v814 = vpop.f32.mrb[0].mxu0
    %815 = vmatprep.mubr.bf16.mxu0 0
    %816 = vmatmul.mubr.bf16.gmra.mrb[0].mxu0 %v465
    %v817 = vpop.f32.mrb[0].mxu0
    %v818 = vadd.f32 0.0, %v817
    %v819 = vpop.f32.mrb[0].mxu0
    %v820 = vpop.f32.mrb[0].mxu0
    %v821 = vadd.f32 0.0, %v820
    %v822 = vpop.f32.mrb[0].mxu0
    %823 = vmatprep.mubr.bf16.mxu0 0
    %824 = vmatmul.mubr.bf16.gmra.mrb[0].mxu0 %v466
    %v825 = vpop.f32.mrb[0].mxu0
    %v826 = vadd.f32 0.0, %v825
    %v827 = vpop.f32.mrb[0].mxu0
    %v828 = vpop.f32.mrb[0].mxu0
    %v829 = vadd.f32 0.0, %v828
    %v830 = vpop.f32.mrb[0].mxu0
    %831 = vmatprep.mubr.bf16.mxu0 0
    %832 = vmatmul.mubr.bf16.gmra.mrb[0].mxu0 %v467
    %v833 = vpop.f32.mrb[0].mxu0
    %v834 = vadd.f32 0.0, %v833
    %v835 = vpop.f32.mrb[0].mxu0
    %v836 = vpop.f32.mrb[0].mxu0
    %v837 = vadd.f32 0.0, %v836
    %v838 = vpop.f32.mrb[0].mxu0
    %839 = vmatprep.mubr.bf16.mxu0 0
    %840 = vmatmul.mubr.bf16.gmra.mrb[0].mxu0 %v468
    %v841 = vpop.f32.mrb[0].mxu0
    %v842 = vadd.f32 0.0, %v841
    %v843 = vpop.f32.mrb[0].mxu0
    %v844 = vpop.f32.mrb[0].mxu0
    %v845 = vadd.f32 0.0, %v844
    %v846 = vpop.f32.mrb[0].mxu0
    %847 = vmatprep.mubr.bf16.mxu0 0
    %848 = vmatmul.mubr.bf16.gmra.mrb[0].mxu0 %v469
    %v849 = vpop.f32.mrb[0].mxu0
    %v850 = vadd.f32 0.0, %v849
    %v851 = vpop.f32.mrb[0].mxu0
    %v852 = vpop.f32.mrb[0].mxu0
    %v853 = vadd.f32 0.0, %v852
    %v854 = vpop.f32.mrb[0].mxu0
    %855 = vdwg.mxu0
    %v856 = vsub.f32 %v794, %v328
    %v857 = vsub.f32 %v797, %v333
    %v858 = vsub.f32 %v802, %v338
    %v859 = vsub.f32 %v805, %v343
    %v860 = vsub.f32 %v810, %v348
    %v861 = vsub.f32 %v813, %v353
    %v862 = vsub.f32 %v818, %v358
    %v863 = vsub.f32 %v821, %v363
    %v864 = vsub.f32 %v826, %v368
    %v865 = vsub.f32 %v829, %v373
    %v866 = vsub.f32 %v834, %v378
    %v867 = vsub.f32 %v837, %v383
    %v868 = vsub.f32 %v842, %v388
    %v869 = vsub.f32 %v845, %v393
    %v870 = vsub.f32 %v850, %v398
    %v871 = vsub.f32 %v853, %v403
    %v872 = vmul.f32 %v856, %v856
    %v873 = vmul.f32 %v857, %v857
    %v874 = vmul.f32 %v858, %v858
    %v875 = vmul.f32 %v859, %v859
    %v876 = vmul.f32 %v860, %v860
    %v877 = vmul.f32 %v861, %v861
    %v878 = vmul.f32 %v862, %v862
    %v879 = vmul.f32 %v863, %v863
    %v880 = vmul.f32 %v864, %v864
    %v881 = vmul.f32 %v865, %v865
    %v882 = vmul.f32 %v866, %v866
    %v883 = vmul.f32 %v867, %v867
    %v884 = vmul.f32 %v868, %v868
    %v885 = vmul.f32 %v869, %v869
    %v886 = vmul.f32 %v870, %v870
    %v887 = vmul.f32 %v871, %v871
    %888 = vadd.xlane.f32.xlu0 %v872
    %v889 = vpop.xlane.xlu0 %888
    %890 = vadd.xlane.f32.xlu0 %v873
    %v891 = vpop.xlane.xlu0 %890
    %892 = vadd.xlane.f32.xlu0 %v874
    %v893 = vpop.xlane.xlu0 %892
    %894 = vadd.xlane.f32.xlu0 %v875
    %v895 = vpop.xlane.xlu0 %894
    %896 = vadd.xlane.f32.xlu0 %v876
    %v897 = vpop.xlane.xlu0 %896
    %898 = vadd.xlane.f32.xlu0 %v877
    %v899 = vpop.xlane.xlu0 %898
    %900 = vadd.xlane.f32.xlu0 %v878
    %v901 = vpop.xlane.xlu0 %900
    %902 = vadd.xlane.f32.xlu0 %v879
    %v903 = vpop.xlane.xlu0 %902
    %904 = vadd.xlane.f32.xlu0 %v880
    %v905 = vpop.xlane.xlu0 %904
    %906 = vadd.xlane.f32.xlu0 %v881
    %v907 = vpop.xlane.xlu0 %906
    %908 = vadd.xlane.f32.xlu0 %v882
    %v909 = vpop.xlane.xlu0 %908
    %910 = vadd.xlane.f32.xlu0 %v883
    %v911 = vpop.xlane.xlu0 %910
    %912 = vadd.xlane.f32.xlu0 %v884
    %v913 = vpop.xlane.xlu0 %912
    %914 = vadd.xlane.f32.xlu0 %v885
    %v915 = vpop.xlane.xlu0 %914
    %916 = vadd.xlane.f32.xlu0 %v886
    %v917 = vpop.xlane.xlu0 %916
    %918 = vadd.xlane.f32.xlu0 %v887
    %v919 = vpop.xlane.xlu0 %918
    %v920 = vadd.f32 %v889, 1e-30
    %v921 = vadd.f32 %v891, 1e-30
    %v922 = vadd.f32 %v893, 1e-30
    %v923 = vadd.f32 %v895, 1e-30
    %v924 = vadd.f32 %v897, 1e-30
    %v925 = vadd.f32 %v899, 1e-30
    %v926 = vadd.f32 %v901, 1e-30
    %v927 = vadd.f32 %v903, 1e-30
    %v928 = vadd.f32 %v905, 1e-30
    %v929 = vadd.f32 %v907, 1e-30
    %v930 = vadd.f32 %v909, 1e-30
    %v931 = vadd.f32 %v911, 1e-30
    %v932 = vadd.f32 %v913, 1e-30
    %v933 = vadd.f32 %v915, 1e-30
    %v934 = vadd.f32 %v917, 1e-30
    %v935 = vadd.f32 %v919, 1e-30
    %v936 = vrsqrt.pop %v920
    %v937 = vrsqrt.pop %v921
    %v938 = vrsqrt.pop %v922
    %v939 = vrsqrt.pop %v923
    %v940 = vrsqrt.pop %v924
    %v941 = vrsqrt.pop %v925
    %v942 = vrsqrt.pop %v926
    %v943 = vrsqrt.pop %v927
    %v944 = vrsqrt.pop %v928
    %v945 = vrsqrt.pop %v929
    %v946 = vrsqrt.pop %v930
    %v947 = vrsqrt.pop %v931
    %v948 = vrsqrt.pop %v932
    %v949 = vrsqrt.pop %v933
    %v950 = vrsqrt.pop %v934
    %v951 = vrsqrt.pop %v935
    %v952 = vmul.f32 %v936, 0.5
    %v953 = vmul.f32 %v937, 0.5
    %v954 = vmul.f32 %v938, 0.5
    %v955 = vmul.f32 %v939, 0.5
    %v956 = vmul.f32 %v940, 0.5
    %v957 = vmul.f32 %v941, 0.5
    %v958 = vmul.f32 %v942, 0.5
    %v959 = vmul.f32 %v943, 0.5
    %v960 = vmul.f32 %v944, 0.5
    %v961 = vmul.f32 %v945, 0.5
    %v962 = vmul.f32 %v946, 0.5
    %v963 = vmul.f32 %v947, 0.5
    %v964 = vmul.f32 %v948, 0.5
    %v965 = vmul.f32 %v949, 0.5
    %v966 = vmul.f32 %v950, 0.5
    %v967 = vmul.f32 %v951, 0.5
    %v968 = vsub.f32 1.0, %v952
    %v969 = vsub.f32 1.0, %v953
    %v970 = vsub.f32 1.0, %v954
    %v971 = vsub.f32 1.0, %v955
    %v972 = vsub.f32 1.0, %v956
    %v973 = vsub.f32 1.0, %v957
    %v974 = vsub.f32 1.0, %v958
    %v975 = vsub.f32 1.0, %v959
    %v976 = vsub.f32 1.0, %v960
    %v977 = vsub.f32 1.0, %v961
    %v978 = vsub.f32 1.0, %v962
    %v979 = vsub.f32 1.0, %v963
    %v980 = vsub.f32 1.0, %v964
    %v981 = vsub.f32 1.0, %v965
    %v982 = vsub.f32 1.0, %v966
    %v983 = vsub.f32 1.0, %v967
    %v984 = vmax.f32 %v968, 0.0
    %v985 = vmax.f32 %v969, 0.0
    %v986 = vmax.f32 %v970, 0.0
    %v987 = vmax.f32 %v971, 0.0
    %v988 = vmax.f32 %v972, 0.0
    %v989 = vmax.f32 %v973, 0.0
    %v990 = vmax.f32 %v974, 0.0
    %v991 = vmax.f32 %v975, 0.0
    %v992 = vmax.f32 %v976, 0.0
    %v993 = vmax.f32 %v977, 0.0
    %v994 = vmax.f32 %v978, 0.0
    %v995 = vmax.f32 %v979, 0.0
    %v996 = vmax.f32 %v980, 0.0
    %v997 = vmax.f32 %v981, 0.0
    %v998 = vmax.f32 %v982, 0.0
    %v999 = vmax.f32 %v983, 0.0
    %v1000 = vmul.f32 %v984, %v856
    %v1001 = vmul.f32 %v985, %v857
    %v1002 = vmul.f32 %v986, %v858
    %v1003 = vmul.f32 %v987, %v859
    %v1004 = vmul.f32 %v988, %v860
    %v1005 = vmul.f32 %v989, %v861
    %v1006 = vmul.f32 %v990, %v862
    %v1007 = vmul.f32 %v991, %v863
    %v1008 = vmul.f32 %v992, %v864
    %v1009 = vmul.f32 %v993, %v865
    %v1010 = vmul.f32 %v994, %v866
    %v1011 = vmul.f32 %v995, %v867
    %v1012 = vmul.f32 %v996, %v868
    %v1013 = vmul.f32 %v997, %v869
    %v1014 = vmul.f32 %v998, %v870
    %v1015 = vmul.f32 %v999, %v871
    %v1016 = vadd.f32 %v328, %v1000
    %v1017 = vadd.f32 %v333, %v1001
    %v1018 = vadd.f32 %v338, %v1002
    %v1019 = vadd.f32 %v343, %v1003
    %v1020 = vadd.f32 %v348, %v1004
    %v1021 = vadd.f32 %v353, %v1005
    %v1022 = vadd.f32 %v358, %v1006
    %v1023 = vadd.f32 %v363, %v1007
    %v1024 = vadd.f32 %v368, %v1008
    %v1025 = vadd.f32 %v373, %v1009
    %v1026 = vadd.f32 %v378, %v1010
    %v1027 = vadd.f32 %v383, %v1011
    %v1028 = vadd.f32 %v388, %v1012
    %v1029 = vadd.f32 %v393, %v1013
    %v1030 = vadd.f32 %v398, %v1014
    %v1031 = vadd.f32 %v403, %v1015
    %v1032 = vpack.c.bf16 %v1017, %v1016
    %v1033 = vpack.c.bf16 %v1019, %v1018
    %v1034 = vpack.c.bf16 %v1021, %v1020
    %v1035 = vpack.c.bf16 %v1023, %v1022
    %v1036 = vpack.c.bf16 %v1025, %v1024
    %v1037 = vpack.c.bf16 %v1027, %v1026
    %v1038 = vpack.c.bf16 %v1029, %v1028
    %v1039 = vpack.c.bf16 %v1031, %v1030
    %1040 = vmatprep.subr.bf16.mxu0 0
    %1041 = vmatpush1.bf16.msra.mxu0 %v1032
    %1042 = vmatprep.subr.bf16.mxu0 0
    %1043 = vmatpush1.bf16.msra.mxu0 %v1033
    %1044 = vmatprep.subr.bf16.mxu0 0
    %1045 = vmatpush1.bf16.msra.mxu0 %v1034
    %1046 = vmatprep.subr.bf16.mxu0 0
    %1047 = vmatpush1.bf16.msra.mxu0 %v1035
    %1048 = vmatprep.subr.bf16.mxu0 0
    %1049 = vmatpush1.bf16.msra.mxu0 %v1036
    %1050 = vmatprep.subr.bf16.mxu0 0
    %1051 = vmatpush1.bf16.msra.mxu0 %v1037
    %1052 = vmatprep.subr.bf16.mxu0 0
    %1053 = vmatpush1.bf16.msra.mxu0 %v1038
    %1054 = vmatprep.subr.bf16.mxu0 0
    %1055 = vmatpush1.bf16.msra.mxu0 %v1039
    %1056 = vmatprep.subr.bf16.mxu0 0
    %1057 = vmatpush1.bf16.msra.mxu0 0
    %1058 = vmatprep.subr.bf16.mxu0 0
    %1059 = vmatpush1.bf16.msra.mxu0 0
    %1060 = vmatprep.subr.bf16.mxu0 0
    %1061 = vmatpush1.bf16.msra.mxu0 0
    %1062 = vmatprep.subr.bf16.mxu0 0
    %1063 = vmatpush1.bf16.msra.mxu0 0
    %1064 = vmatprep.subr.bf16.mxu0 0
    %1065 = vmatpush1.bf16.msra.mxu0 0
    %1066 = vmatprep.subr.bf16.mxu0 0
    %1067 = vmatpush1.bf16.msra.mxu0 0
    %1068 = vmatprep.subr.bf16.mxu0 0
    %1069 = vmatpush1.bf16.msra.mxu0 0
    %1070 = vmatprep.subr.bf16.mxu0 0
    %1071 = vmatpush1.bf16.msra.mxu0 0
    %1072 = vmatprep.mubr.bf16.mxu0 0
    %1073 = vmatmul.mubr.bf16.gmra.mrb[0].mxu0 %v462
    %v1074 = vpop.f32.mrb[0].mxu0
    %v1075 = vadd.f32 0.0, %v1074
    %v1076 = vpop.f32.mrb[0].mxu0
    %v1077 = vpop.f32.mrb[0].mxu0
    %v1078 = vadd.f32 0.0, %v1077
    %v1079 = vpop.f32.mrb[0].mxu0
    %1080 = vmatprep.mubr.bf16.mxu0 0
    %1081 = vmatmul.mubr.bf16.gmra.mrb[0].mxu0 %v463
    %v1082 = vpop.f32.mrb[0].mxu0
    %v1083 = vadd.f32 0.0, %v1082
    %v1084 = vpop.f32.mrb[0].mxu0
    %v1085 = vpop.f32.mrb[0].mxu0
    %v1086 = vadd.f32 0.0, %v1085
    %v1087 = vpop.f32.mrb[0].mxu0
    %1088 = vmatprep.mubr.bf16.mxu0 0
    %1089 = vmatmul.mubr.bf16.gmra.mrb[0].mxu0 %v464
    %v1090 = vpop.f32.mrb[0].mxu0
    %v1091 = vadd.f32 0.0, %v1090
    %v1092 = vpop.f32.mrb[0].mxu0
    %v1093 = vpop.f32.mrb[0].mxu0
    %v1094 = vadd.f32 0.0, %v1093
    %v1095 = vpop.f32.mrb[0].mxu0
    %1096 = vmatprep.mubr.bf16.mxu0 0
    %1097 = vmatmul.mubr.bf16.gmra.mrb[0].mxu0 %v465
    %v1098 = vpop.f32.mrb[0].mxu0
    %v1099 = vadd.f32 0.0, %v1098
    %v1100 = vpop.f32.mrb[0].mxu0
    %v1101 = vpop.f32.mrb[0].mxu0
    %v1102 = vadd.f32 0.0, %v1101
    %v1103 = vpop.f32.mrb[0].mxu0
    %1104 = vmatprep.mubr.bf16.mxu0 0
    %1105 = vmatmul.mubr.bf16.gmra.mrb[0].mxu0 %v466
    %v1106 = vpop.f32.mrb[0].mxu0
    %v1107 = vadd.f32 0.0, %v1106
    %v1108 = vpop.f32.mrb[0].mxu0
    %v1109 = vpop.f32.mrb[0].mxu0
    %v1110 = vadd.f32 0.0, %v1109
    %v1111 = vpop.f32.mrb[0].mxu0
    %1112 = vmatprep.mubr.bf16.mxu0 0
    %1113 = vmatmul.mubr.bf16.gmra.mrb[0].mxu0 %v467
    %v1114 = vpop.f32.mrb[0].mxu0
    %v1115 = vadd.f32 0.0, %v1114
    %v1116 = vpop.f32.mrb[0].mxu0
    %v1117 = vpop.f32.mrb[0].mxu0
    %v1118 = vadd.f32 0.0, %v1117
    %v1119 = vpop.f32.mrb[0].mxu0
    %1120 = vmatprep.mubr.bf16.mxu0 0
    %1121 = vmatmul.mubr.bf16.gmra.mrb[0].mxu0 %v468
    %v1122 = vpop.f32.mrb[0].mxu0
    %v1123 = vadd.f32 0.0, %v1122
    %v1124 = vpop.f32.mrb[0].mxu0
    %v1125 = vpop.f32.mrb[0].mxu0
    %v1126 = vadd.f32 0.0, %v1125
    %v1127 = vpop.f32.mrb[0].mxu0
    %1128 = vmatprep.mubr.bf16.mxu0 0
    %1129 = vmatmul.mubr.bf16.gmra.mrb[0].mxu0 %v469
    %v1130 = vpop.f32.mrb[0].mxu0
    %v1131 = vadd.f32 0.0, %v1130
    %v1132 = vpop.f32.mrb[0].mxu0
    %v1133 = vpop.f32.mrb[0].mxu0
    %v1134 = vadd.f32 0.0, %v1133
    %v1135 = vpop.f32.mrb[0].mxu0
    %1136 = vdwg.mxu0
    %v1137 = vsub.f32 %v1075, %v328
    %v1138 = vsub.f32 %v1078, %v333
    %v1139 = vsub.f32 %v1083, %v338
    %v1140 = vsub.f32 %v1086, %v343
    %v1141 = vsub.f32 %v1091, %v348
    %v1142 = vsub.f32 %v1094, %v353
    %v1143 = vsub.f32 %v1099, %v358
    %v1144 = vsub.f32 %v1102, %v363
    %v1145 = vsub.f32 %v1107, %v368
    %v1146 = vsub.f32 %v1110, %v373
    %v1147 = vsub.f32 %v1115, %v378
    %v1148 = vsub.f32 %v1118, %v383
    %v1149 = vsub.f32 %v1123, %v388
    %v1150 = vsub.f32 %v1126, %v393
    %v1151 = vsub.f32 %v1131, %v398
    %v1152 = vsub.f32 %v1134, %v403
    %v1153 = vmul.f32 %v1137, %v1137
    %v1154 = vmul.f32 %v1138, %v1138
    %v1155 = vmul.f32 %v1139, %v1139
    %v1156 = vmul.f32 %v1140, %v1140
    %v1157 = vmul.f32 %v1141, %v1141
    %v1158 = vmul.f32 %v1142, %v1142
    %v1159 = vmul.f32 %v1143, %v1143
    %v1160 = vmul.f32 %v1144, %v1144
    %v1161 = vmul.f32 %v1145, %v1145
    %v1162 = vmul.f32 %v1146, %v1146
    %v1163 = vmul.f32 %v1147, %v1147
    %v1164 = vmul.f32 %v1148, %v1148
    %v1165 = vmul.f32 %v1149, %v1149
    %v1166 = vmul.f32 %v1150, %v1150
    %v1167 = vmul.f32 %v1151, %v1151
    %v1168 = vmul.f32 %v1152, %v1152
    %1169 = vadd.xlane.f32.xlu0 %v1153
    %v1170 = vpop.xlane.xlu0 %1169
    %1171 = vadd.xlane.f32.xlu0 %v1154
    %v1172 = vpop.xlane.xlu0 %1171
    %1173 = vadd.xlane.f32.xlu0 %v1155
    %v1174 = vpop.xlane.xlu0 %1173
    %1175 = vadd.xlane.f32.xlu0 %v1156
    %v1176 = vpop.xlane.xlu0 %1175
    %1177 = vadd.xlane.f32.xlu0 %v1157
    %v1178 = vpop.xlane.xlu0 %1177
    %1179 = vadd.xlane.f32.xlu0 %v1158
    %v1180 = vpop.xlane.xlu0 %1179
    %1181 = vadd.xlane.f32.xlu0 %v1159
    %v1182 = vpop.xlane.xlu0 %1181
    %1183 = vadd.xlane.f32.xlu0 %v1160
    %v1184 = vpop.xlane.xlu0 %1183
    %1185 = vadd.xlane.f32.xlu0 %v1161
    %v1186 = vpop.xlane.xlu0 %1185
    %1187 = vadd.xlane.f32.xlu0 %v1162
    %v1188 = vpop.xlane.xlu0 %1187
    %1189 = vadd.xlane.f32.xlu0 %v1163
    %v1190 = vpop.xlane.xlu0 %1189
    %1191 = vadd.xlane.f32.xlu0 %v1164
    %v1192 = vpop.xlane.xlu0 %1191
    %1193 = vadd.xlane.f32.xlu0 %v1165
    %v1194 = vpop.xlane.xlu0 %1193
    %1195 = vadd.xlane.f32.xlu0 %v1166
    %v1196 = vpop.xlane.xlu0 %1195
    %1197 = vadd.xlane.f32.xlu0 %v1167
    %v1198 = vpop.xlane.xlu0 %1197
    %1199 = vadd.xlane.f32.xlu0 %v1168
    %v1200 = vpop.xlane.xlu0 %1199
    %v1201 = vadd.f32 %v1170, 1e-30
    %v1202 = vadd.f32 %v1172, 1e-30
    %v1203 = vadd.f32 %v1174, 1e-30
    %v1204 = vadd.f32 %v1176, 1e-30
    %v1205 = vadd.f32 %v1178, 1e-30
    %v1206 = vadd.f32 %v1180, 1e-30
    %v1207 = vadd.f32 %v1182, 1e-30
    %v1208 = vadd.f32 %v1184, 1e-30
    %v1209 = vadd.f32 %v1186, 1e-30
    %v1210 = vadd.f32 %v1188, 1e-30
    %v1211 = vadd.f32 %v1190, 1e-30
    %v1212 = vadd.f32 %v1192, 1e-30
    %v1213 = vadd.f32 %v1194, 1e-30
    %v1214 = vadd.f32 %v1196, 1e-30
    %v1215 = vadd.f32 %v1198, 1e-30
    %v1216 = vadd.f32 %v1200, 1e-30
    %v1217 = vrsqrt.pop %v1201
    %v1218 = vrsqrt.pop %v1202
    %v1219 = vrsqrt.pop %v1203
    %v1220 = vrsqrt.pop %v1204
    %v1221 = vrsqrt.pop %v1205
    %v1222 = vrsqrt.pop %v1206
    %v1223 = vrsqrt.pop %v1207
    %v1224 = vrsqrt.pop %v1208
    %v1225 = vrsqrt.pop %v1209
    %v1226 = vrsqrt.pop %v1210
    %v1227 = vrsqrt.pop %v1211
    %v1228 = vrsqrt.pop %v1212
    %v1229 = vrsqrt.pop %v1213
    %v1230 = vrsqrt.pop %v1214
    %v1231 = vrsqrt.pop %v1215
    %v1232 = vrsqrt.pop %v1216
    %v1233 = vmul.f32 %v1217, 0.5
    %v1234 = vmul.f32 %v1218, 0.5
    %v1235 = vmul.f32 %v1219, 0.5
    %v1236 = vmul.f32 %v1220, 0.5
    %v1237 = vmul.f32 %v1221, 0.5
    %v1238 = vmul.f32 %v1222, 0.5
    %v1239 = vmul.f32 %v1223, 0.5
    %v1240 = vmul.f32 %v1224, 0.5
    %v1241 = vmul.f32 %v1225, 0.5
    %v1242 = vmul.f32 %v1226, 0.5
    %v1243 = vmul.f32 %v1227, 0.5
    %v1244 = vmul.f32 %v1228, 0.5
    %v1245 = vmul.f32 %v1229, 0.5
    %v1246 = vmul.f32 %v1230, 0.5
    %v1247 = vmul.f32 %v1231, 0.5
    %v1248 = vmul.f32 %v1232, 0.5
    %v1249 = vsub.f32 1.0, %v1233
    %v1250 = vsub.f32 1.0, %v1234
    %v1251 = vsub.f32 1.0, %v1235
    %v1252 = vsub.f32 1.0, %v1236
    %v1253 = vsub.f32 1.0, %v1237
    %v1254 = vsub.f32 1.0, %v1238
    %v1255 = vsub.f32 1.0, %v1239
    %v1256 = vsub.f32 1.0, %v1240
    %v1257 = vsub.f32 1.0, %v1241
    %v1258 = vsub.f32 1.0, %v1242
    %v1259 = vsub.f32 1.0, %v1243
    %v1260 = vsub.f32 1.0, %v1244
    %v1261 = vsub.f32 1.0, %v1245
    %v1262 = vsub.f32 1.0, %v1246
    %v1263 = vsub.f32 1.0, %v1247
    %v1264 = vsub.f32 1.0, %v1248
    %v1265 = vmax.f32 %v1249, 0.0
    %v1266 = vmax.f32 %v1250, 0.0
    %v1267 = vmax.f32 %v1251, 0.0
    %v1268 = vmax.f32 %v1252, 0.0
    %v1269 = vmax.f32 %v1253, 0.0
    %v1270 = vmax.f32 %v1254, 0.0
    %v1271 = vmax.f32 %v1255, 0.0
    %v1272 = vmax.f32 %v1256, 0.0
    %v1273 = vmax.f32 %v1257, 0.0
    %v1274 = vmax.f32 %v1258, 0.0
    %v1275 = vmax.f32 %v1259, 0.0
    %v1276 = vmax.f32 %v1260, 0.0
    %v1277 = vmax.f32 %v1261, 0.0
    %v1278 = vmax.f32 %v1262, 0.0
    %v1279 = vmax.f32 %v1263, 0.0
    %v1280 = vmax.f32 %v1264, 0.0
    %v1281 = vmul.f32 %v1265, %v1137
    %v1282 = vmul.f32 %v1266, %v1138
    %v1283 = vmul.f32 %v1267, %v1139
    %v1284 = vmul.f32 %v1268, %v1140
    %v1285 = vmul.f32 %v1269, %v1141
    %v1286 = vmul.f32 %v1270, %v1142
    %v1287 = vmul.f32 %v1271, %v1143
    %v1288 = vmul.f32 %v1272, %v1144
    %v1289 = vmul.f32 %v1273, %v1145
    %v1290 = vmul.f32 %v1274, %v1146
    %v1291 = vmul.f32 %v1275, %v1147
    %v1292 = vmul.f32 %v1276, %v1148
    %v1293 = vmul.f32 %v1277, %v1149
    %v1294 = vmul.f32 %v1278, %v1150
    %v1295 = vmul.f32 %v1279, %v1151
    %v1296 = vmul.f32 %v1280, %v1152
    %v1297 = vadd.f32 %v328, %v1281
    %v1298 = vadd.f32 %v333, %v1282
    %v1299 = vadd.f32 %v338, %v1283
    %v1300 = vadd.f32 %v343, %v1284
    %v1301 = vadd.f32 %v348, %v1285
    %v1302 = vadd.f32 %v353, %v1286
    %v1303 = vadd.f32 %v358, %v1287
    %v1304 = vadd.f32 %v363, %v1288
    %v1305 = vadd.f32 %v368, %v1289
    %v1306 = vadd.f32 %v373, %v1290
    %v1307 = vadd.f32 %v378, %v1291
    %v1308 = vadd.f32 %v383, %v1292
    %v1309 = vadd.f32 %v388, %v1293
    %v1310 = vadd.f32 %v393, %v1294
    %v1311 = vadd.f32 %v398, %v1295
    %v1312 = vadd.f32 %v403, %v1296
    %1313 = vst [vmem:[%s6] sm:$0xff] %v1297
    %1314 = vst [vmem:[%s6 + $0x8] sm:$0xff] %v1298
    %1315 = vst [vmem:[%s6 + $0x10] sm:$0xff] %v1299
    %1316 = vst [vmem:[%s6 + $0x18] sm:$0xff] %v1300
    %1317 = vst [vmem:[%s6 + $0x20] sm:$0xff] %v1301
    %1318 = vst [vmem:[%s6 + $0x28] sm:$0xff] %v1302
    %1319 = vst [vmem:[%s6 + $0x30] sm:$0xff] %v1303
    %1320 = vst [vmem:[%s6 + $0x38] sm:$0xff] %v1304
    %1321 = vst [vmem:[%s6 + $0x40] sm:$0xff] %v1305
    %1322 = vst [vmem:[%s6 + $0x48] sm:$0xff] %v1306
    %1323 = vst [vmem:[%s6 + $0x50] sm:$0xff] %v1307
    %1324 = vst [vmem:[%s6 + $0x58] sm:$0xff] %v1308
    %1325 = vst [vmem:[%s6 + $0x60] sm:$0xff] %v1309
    %1326 = vst [vmem:[%s6 + $0x68] sm:$0xff] %v1310
    %1327 = vst [vmem:[%s6 + $0x70] sm:$0xff] %v1311
    %1328 = vst [vmem:[%s6 + $0x78] sm:$0xff] %v1312
    // Predicated region
    $region30: #{_airgnn_apply.1} parent=1 // pred_check
      _
    $region31: #{_airgnn_apply.1} parent=1 // pred_check_branch
      %1330 = sbr.rel (0) target = $region33
    $region32: #{_airgnn_apply.1} parent=1 // pred_region
      _
    $region33: #{_airgnn_apply.1} parent=1 // pred_fallthru
      _
    // Predicated region
    $region34: #{_airgnn_apply.1} parent=1 // pred_check
      _
    $region35: #{_airgnn_apply.1} parent=1 // pred_check_branch
      %1332 = sbr.rel (0) target = $region37
    $region36: #{_airgnn_apply.1} parent=1 // pred_region
      _
    $region37: #{_airgnn_apply.1} parent=1 // pred_fallthru
      _
    %1333 = vsyncpa [#allocation3], 1

</llo_original>
